<compile_context>
chip_gen: v6e
topology: v6e:2x2x1
jax: 0.10.0
libtpu: 0.0.40
codegen_flags: <defaults>
</compile_context>

<pallas_src>
import functools

import jax
import jax.numpy as jnp
import numpy as np
from jax.experimental import pallas as pl
from jax.experimental.pallas import tpu as pltpu


def _round_up(a, m):
    return (a + m - 1) // m * m


def _pick_block_b(B, Hp, target_m=256, max_m=1024):
    """How many batch elements to pack per grid step.

    Packing raises the projection matmul's M dimension (MXU row utilization) and
    amortizes the ~0.35us/step grid overhead.  A block that does not cover the
    whole batch must keep (Bblk*Hp) % 8 == 0 so the row-block is (8,128)-legal.
    """
    cands = [d for d in range(1, B + 1)
             if B % d == 0 and (d == B or (d * Hp) % 8 == 0) and d * Hp <= max_m]
    if not cands:
        return B                      # one full-batch block is always legal
    for d in cands:
        if d * Hp >= target_m:
            return d
    return cands[-1]


# ----------------------------------------------------------------------------
# Pallas kernel: one grid step per block of Bblk batch elements.
# ----------------------------------------------------------------------------
def _attention_conv_kernel(xf_ref, w_ref, rel_ref, o_ref, proj_ref, *,
                           K, H, W, Cout, pad, Bblk, Hp, slab, k_base, v_base):
    WC = W * Cout

    # One fused MXU matmul for every row of this batch block (M = Bblk*Hp).
    # The spatially block-diagonal weight emits q plus K pre-shifted key slabs
    # and K pre-shifted value slabs, each 128-lane aligned, so every later read
    # is a plain aligned column block (no XLU lane rotations).
    proj_ref[...] = jnp.dot(xf_ref[...], w_ref[...],
                            preferred_element_type=jnp.float32)

    # Hoist the rel-bias row broadcasts out of the loops (JAX does not CSE them).
    rel_b = [jnp.broadcast_to(rel_ref[o:o + 1, :], (H, WC)) for o in range(K * K)]

    for b in range(Bblk):             # static unroll; Bblk is small
        r0 = b * Hp
        q = proj_ref[pl.ds(r0 + pad, H), pl.ds(0, WC)]          # (H, WC)

        def k_at(dy, dx):
            return proj_ref[pl.ds(r0 + dy, H), pl.ds(k_base + dx * slab, WC)]

        # Pass 1: running max (numerically stable softmax).  Logits are NOT
        # cached in VMEM; recomputing them in pass 2 is 2 cheap VALU ops per
        # offset and avoids K*K*(H*WC) vector stores (v5e has a single vst slot).
        m = jnp.full((H, WC), -jnp.inf, dtype=jnp.float32)
        for dy in range(K):
            for dx in range(K):
                lg = q * (k_at(dy, dx) + rel_b[dy * K + dx])
                m = jnp.maximum(m, lg)

        # Pass 2: softmax numerator / denominator.  Value slabs are only read
        # here, keeping live ranges short (no spill pressure).
        s = jnp.zeros((H, WC), dtype=jnp.float32)
        acc = jnp.zeros((H, WC), dtype=jnp.float32)
        for dy in range(K):
            for dx in range(K):
                lg = q * (k_at(dy, dx) + rel_b[dy * K + dx])
                pw = jnp.exp(lg - m)
                s = s + pw
                v = proj_ref[pl.ds(r0 + dy, H), pl.ds(v_base + dx * slab, WC)]
                acc = acc + pw * v

        # EUP reciprocal + VPU multiply instead of a VALU divide sequence.
        o_ref[b] = (acc * pl.reciprocal(s, approx=False)).astype(o_ref.dtype)


# ----------------------------------------------------------------------------
# Wrapper (glue): NCHW <-> lane-dense layouts, padding, fused weight + rel table.
# ----------------------------------------------------------------------------
def attention_conv(x_nchw, wq, wk, wv, rel_h, rel_w, *, kernel_size, stride=1,
                   padding=0, matmul_dtype=jnp.float32):
    assert stride == 1 and 2 * padding == kernel_size - 1, (
        "forward only shape-consistent for stride=1, padding=(K-1)//2")
    B, Cin, H, W = x_nchw.shape
    Cout = wq.shape[0]
    assert Cout % 2 == 0, "out_channels must be even (rel_h/rel_w split)"
    Chalf = Cout // 2
    K = kernel_size
    p = padding
    Hp, Wp = H + 2 * p, W + 2 * p
    WpCin = Wp * Cin

    WC = W * Cout                      # lane width of the working layout (128 here)
    slab = _round_up(WC, 128)          # keep q / per-dx k / per-dx v slabs 128-lane aligned
    k_base = slab
    v_base = slab * (1 + K)
    n_tot = slab * (1 + 2 * K)

    Bblk = _pick_block_b(B, Hp)
    grid_b = B // Bblk

    # NCHW -> NHWC, zero-pad spatially (keys/values see the zero halo, like
    # PyTorch), flatten (W, Cin) onto lanes and (B, Hp) onto rows.
    x_nhwc = jnp.transpose(x_nchw, (0, 2, 3, 1)).astype(jnp.float32)
    xp = jnp.pad(x_nhwc, ((0, 0), (p, p), (p, p), (0, 0)))
    xpf = xp.reshape(B * Hp, WpCin).astype(matmul_dtype)

    # 1x1 conv weights (Cout, Cin, 1, 1) -> (Cin, Cout).
    wq_t = wq.reshape(Cout, Cin).T.astype(jnp.float32)
    wk_t = wk.reshape(Cout, Cin).T.astype(jnp.float32)
    wv_t = wv.reshape(Cout, Cin).T.astype(jnp.float32)

    # Fused, spatially block-diagonal QKV weight: (Wp*Cin, n_tot).
    #   col layout: [ q (WC) | k slab dx=0..K-1 (slab each) | v slab dx=0..K-1 ]
    #   * q slab:     out col (w, c) <- in col (w + p,  ci) with Wq
    #   * k slab dx:  out col (w, c) <- in col (w + dx, ci) with Wk  (dx shift pre-baked)
    #   * v slab dx:  out col (w, c) <- in col (w + dx, ci) with Wv
    # So every in-kernel read is a 128-lane-aligned column block; the only shift
    # left is the dy row offset, a cheap sublane-offset VMEM load.
    # TODO(synk): this fused weight scales O(Wp*Cin*(2K+1)*W*Cout) and is a
    # toy-shape trick; for production W/C use a plain (H*W, Cin) x (Cin, 3*Cout)
    # projection plus pltpu.roll or a W-tiled halo grid instead.
    eye_wp = jnp.eye(Wp, dtype=jnp.float32)

    def spatial_block(sel, w_t):       # sel: (Wp, W), w_t: (Cin, Cout)
        return jnp.einsum('aw,ic->aiwc', sel, w_t).reshape(WpCin, W * Cout)

    w_fused = jnp.zeros((WpCin, n_tot), dtype=jnp.float32)
    w_fused = w_fused.at[:, 0:WC].set(spatial_block(eye_wp[:, p:p + W], wq_t))
    for dx in range(K):
        sel = eye_wp[:, dx:dx + W]
        w_fused = w_fused.at[:, k_base + dx * slab:k_base + dx * slab + WC].set(
            spatial_block(sel, wk_t))
        w_fused = w_fused.at[:, v_base + dx * slab:v_base + dx * slab + WC].set(
            spatial_block(sel, wv_t))
    w_fused = w_fused.astype(matmul_dtype)

    # rel bias table: rel_flat[dy*K+dx, w*Cout+c] = rel_h[c, dy] for c < Chalf,
    #                                               rel_w[c-Chalf, dx] otherwise.
    rel_h_s = rel_h.reshape(Chalf, K).astype(jnp.float32)          # [c, dy]
    rel_w_s = rel_w.reshape(Chalf, K).astype(jnp.float32)          # [c, dx]
    rel_kk = jnp.concatenate([
        jnp.broadcast_to(rel_h_s.T[:, None, :], (K, K, Chalf)),    # varies with dy
        jnp.broadcast_to(rel_w_s.T[None, :, :], (K, K, Chalf)),    # varies with dx
    ], axis=-1)                                                    # (K, K, Cout)
    rel_flat = jnp.broadcast_to(
        rel_kk.reshape(K * K, 1, Cout), (K * K, W, Cout)).reshape(K * K, WC)

    kernel = functools.partial(
        _attention_conv_kernel, K=K, H=H, W=W, Cout=Cout, pad=p,
        Bblk=Bblk, Hp=Hp, slab=slab, k_base=k_base, v_base=v_base)

    # Computed VMEM budget (double-buffered in/out blocks + scratch) with
    # headroom, capped well below v7x's 64 MiB physical VMEM.
    isz = jnp.dtype(matmul_dtype).itemsize
    footprint = (2 * Bblk * Hp * WpCin * isz            # x block (double-buffered)
                 + 2 * WpCin * n_tot * isz              # fused weight
                 + 2 * K * K * WC * 4                   # rel table
                 + 2 * Bblk * H * WC * 4                # out block
                 + Bblk * Hp * n_tot * 4)               # projection scratch
    vmem_limit = int(min(48 * 1024 * 1024, max(8 * 1024 * 1024, 2 * footprint)))

    # TODO(synk): for H beyond toy sizes, add an H-tiling grid axis with a
    # (K-1)-row halo so per-step VMEM stays bounded and DMA overlaps compute.
    out_flat = pl.pallas_call(
        kernel,
        out_shape=jax.ShapeDtypeStruct((B, H, WC), jnp.float32),
        grid_spec=pltpu.PrefetchScalarGridSpec(
            num_scalar_prefetch=0,
            grid=(grid_b,),
            in_specs=[
                pl.BlockSpec((Bblk * Hp, WpCin), lambda i: (i, 0)),
                pl.BlockSpec((WpCin, n_tot), lambda i: (0, 0)),
                pl.BlockSpec((K * K, WC), lambda i: (0, 0)),
            ],
            out_specs=pl.BlockSpec((Bblk, H, WC), lambda i: (i, 0, 0)),
            scratch_shapes=[pltpu.VMEM((Bblk * Hp, n_tot), jnp.float32)],
        ),
        compiler_params=pltpu.CompilerParams(
            dimension_semantics=("parallel",),
            vmem_limit_bytes=vmem_limit,
        ),
    )(xpf, w_fused, rel_flat)

    # (B, H, W*Cout) -> (B, Cout, H, W) to match the PyTorch module's convention.
    out = out_flat.reshape(B, H, W, Cout)
    return jnp.transpose(out, (0, 3, 1, 2))


# ----------------------------------------------------------------------------
# Pure-JAX reference (mirrors the PyTorch forward exactly) for verification.
# ----------------------------------------------------------------------------
def attention_conv_ref(x_nchw, wq, wk, wv, rel_h, rel_w, *, kernel_size, padding):
    B, Cin, H, W = x_nchw.shape
    Cout = wq.shape[0]
    Chalf = Cout // 2
    K, p = kernel_size, padding
    xpad = jnp.pad(x_nchw, ((0, 0), (0, 0), (p, p), (p, p)))

    q = jnp.einsum('oc,bchw->bohw', wq.reshape(Cout, Cin), x_nchw)
    kp = jnp.einsum('oc,bchw->bohw', wk.reshape(Cout, Cin), xpad)
    vp = jnp.einsum('oc,bchw->bohw', wv.reshape(Cout, Cin), xpad)

    def unfold(t):  # (B, C, Hp, Wp) -> (B, C, H, W, K_h, K_w)
        return jnp.stack(
            [jnp.stack([t[:, :, dy:dy + H, dx:dx + W] for dx in range(K)], axis=-1)
             for dy in range(K)], axis=-2)

    k_unf = unfold(kp)
    v_unf = unfold(vp)
    k_h = k_unf[:, :Chalf] + rel_h[None]
    k_w = k_unf[:, Chalf:] + rel_w[None]
    k_cat = jnp.concatenate([k_h, k_w], axis=1).reshape(B, Cout, H, W, K * K)
    v_flat = v_unf.reshape(B, Cout, H, W, K * K)

    logits = q[..., None] * k_cat
    att = jax.nn.softmax(logits, axis=-1)
    return jnp.sum(att * v_flat, axis=-1)


if __name__ == "__main__":
    # Shapes consistent with AttentionConv(4, 8, kernel_size=3, stride=1,
    # padding=1, groups=2). Groups only reshape channels; math unchanged.
    B, Cin, Cout, H, W = 2, 4, 8, 16, 16
    K, stride, padding = 3, 1, 1
    Chalf = Cout // 2

    key = jax.random.PRNGKey(0)
    kx, kq, kk, kv, krh, krw = jax.random.split(key, 6)

    x = jax.random.normal(kx, (B, Cin, H, W), dtype=jnp.float32)

    # Deterministic parameter init (kaiming_normal_ fan_out: std = sqrt(2 / Cout)).
    std = float(np.sqrt(2.0 / Cout))
    wq = jax.random.normal(kq, (Cout, Cin, 1, 1), dtype=jnp.float32) * std
    wk = jax.random.normal(kk, (Cout, Cin, 1, 1), dtype=jnp.float32) * std
    wv = jax.random.normal(kv, (Cout, Cin, 1, 1), dtype=jnp.float32) * std
    rel_h = jax.random.normal(krh, (Chalf, 1, 1, K, 1), dtype=jnp.float32)
    rel_w = jax.random.normal(krw, (Chalf, 1, 1, 1, K), dtype=jnp.float32)

    ref = attention_conv_ref(x, wq, wk, wv, rel_h, rel_w,
                             kernel_size=K, padding=padding)

    # Full-precision path: must match the f32 reference tightly.
    out = attention_conv(x, wq, wk, wv, rel_h, rel_w,
                         kernel_size=K, stride=stride, padding=padding)
    out = jax.block_until_ready(out)
    np.testing.assert_allclose(np.asarray(out), np.asarray(ref), rtol=1e-4, atol=1e-4)
    assert out.shape == (B, Cout, H, W)

    # bf16 projection operands (v6e/v7x MXU path); softmax stays f32. Loose check.
    out_bf16 = attention_conv(x, wq, wk, wv, rel_h, rel_w,
                              kernel_size=K, stride=stride, padding=padding,
                              matmul_dtype=jnp.bfloat16)
    out_bf16 = jax.block_until_ready(out_bf16)
    np.testing.assert_allclose(np.asarray(out_bf16), np.asarray(ref), rtol=0.1, atol=0.1)

    print("KERNEL_OK")
</pallas_src>

<mosaic_0001>
module attributes {stable_mosaic.version = 11 : i64} {
  func.func @_attention_conv_kernel(%arg0: i32, %arg1: memref<36x72xf32, #tpu.memory_space<vmem>>, %arg2: memref<72x896xf32, #tpu.memory_space<vmem>>, %arg3: memref<9x128xf32, #tpu.memory_space<vmem>>, %arg4: memref<2x16x128xf32, #tpu.memory_space<vmem>>, %arg5: memref<36x896xf32, #tpu.memory_space<vmem>>) attributes {dimension_semantics = [#tpu.dimension_semantics<parallel>], iteration_bounds = array<i64: 1>, scalar_prefetch = 0 : i64, scratch_operands = 1 : i64, tpu.core_type = #tpu.core_type<tc>, window_params = [{transform_indices = @transform_0, window_bounds = array<i64: 36, 72>}, {pipeline_mode = #tpu.pipeline_mode<synchronous>, transform_indices = @transform_1, window_bounds = array<i64: 72, 896>}, {pipeline_mode = #tpu.pipeline_mode<synchronous>, transform_indices = @transform_2, window_bounds = array<i64: 9, 128>}, {transform_indices = @transform_3, window_bounds = array<i64: 2, 16, 128>}]} {
    %c0 = arith.constant 0 : index
    %c0_0 = arith.constant 0 : index
    %0 = vector.load %arg1[%c0, %c0_0] : memref<36x72xf32, #tpu.memory_space<vmem>>, vector<36x72xf32>
    %c0_1 = arith.constant 0 : index
    %c0_2 = arith.constant 0 : index
    %1 = vector.load %arg2[%c0_1, %c0_2] : memref<72x896xf32, #tpu.memory_space<vmem>>, vector<72x896xf32>
    %cst = arith.constant dense<0.000000e+00> : vector<36x896xf32>
    %2 = tpu.matmul %0, %1, %cst {dimension_numbers = #tpu.dot_dimension_numbers<[1], [0], [0], [1], [0, 0, 1, 1], [], []>} : vector<36x72xf32>, vector<72x896xf32>, vector<36x896xf32> -> vector<36x896xf32>
    %c0_3 = arith.constant 0 : index
    %c0_4 = arith.constant 0 : index
    %3 = vector.load %arg5[%c0_3, %c0_4] : memref<36x896xf32, #tpu.memory_space<vmem>>, vector<36x896xf32>
    tpu.vector_store %arg5[%c0_3, %c0_4], %2 {strides = array<i32>} : memref<36x896xf32, #tpu.memory_space<vmem>>, vector<36x896xf32>,
    %c0_5 = arith.constant 0 : index
    %c0_6 = arith.constant 0 : index
    %4 = vector.load %arg3[%c0_5, %c0_6] : memref<9x128xf32, #tpu.memory_space<vmem>>, vector<1x128xf32>
    %5 = vector.shape_cast %4 : vector<1x128xf32> to vector<1x128xf32>
    %6 = vector.broadcast %5 : vector<1x128xf32> to vector<16x128xf32>
    %c1 = arith.constant 1 : index
    %c0_7 = arith.constant 0 : index
    %7 = vector.load %arg3[%c1, %c0_7] : memref<9x128xf32, #tpu.memory_space<vmem>>, vector<1x128xf32>
    %8 = vector.shape_cast %7 : vector<1x128xf32> to vector<1x128xf32>
    %9 = vector.broadcast %8 : vector<1x128xf32> to vector<16x128xf32>
    %c2 = arith.constant 2 : index
    %c0_8 = arith.constant 0 : index
    %10 = vector.load %arg3[%c2, %c0_8] : memref<9x128xf32, #tpu.memory_space<vmem>>, vector<1x128xf32>
    %11 = vector.shape_cast %10 : vector<1x128xf32> to vector<1x128xf32>
    %12 = vector.broadcast %11 : vector<1x128xf32> to vector<16x128xf32>
    %c3 = arith.constant 3 : index
    %c0_9 = arith.constant 0 : index
    %13 = vector.load %arg3[%c3, %c0_9] : memref<9x128xf32, #tpu.memory_space<vmem>>, vector<1x128xf32>
    %14 = vector.shape_cast %13 : vector<1x128xf32> to vector<1x128xf32>
    %15 = vector.broadcast %14 : vector<1x128xf32> to vector<16x128xf32>
    %c4 = arith.constant 4 : index
    %c0_10 = arith.constant 0 : index
    %16 = vector.load %arg3[%c4, %c0_10] : memref<9x128xf32, #tpu.memory_space<vmem>>, vector<1x128xf32>
    %17 = vector.shape_cast %16 : vector<1x128xf32> to vector<1x128xf32>
    %18 = vector.broadcast %17 : vector<1x128xf32> to vector<16x128xf32>
    %c5 = arith.constant 5 : index
    %c0_11 = arith.constant 0 : index
    %19 = vector.load %arg3[%c5, %c0_11] : memref<9x128xf32, #tpu.memory_space<vmem>>, vector<1x128xf32>
    %20 = vector.shape_cast %19 : vector<1x128xf32> to vector<1x128xf32>
    %21 = vector.broadcast %20 : vector<1x128xf32> to vector<16x128xf32>
    %c6 = arith.constant 6 : index
    %c0_12 = arith.constant 0 : index
    %22 = vector.load %arg3[%c6, %c0_12] : memref<9x128xf32, #tpu.memory_space<vmem>>, vector<1x128xf32>
    %23 = vector.shape_cast %22 : vector<1x128xf32> to vector<1x128xf32>
    %24 = vector.broadcast %23 : vector<1x128xf32> to vector<16x128xf32>
    %c7 = arith.constant 7 : index
    %c0_13 = arith.constant 0 : index
    %25 = vector.load %arg3[%c7, %c0_13] : memref<9x128xf32, #tpu.memory_space<vmem>>, vector<1x128xf32>
    %26 = vector.shape_cast %25 : vector<1x128xf32> to vector<1x128xf32>
    %27 = vector.broadcast %26 : vector<1x128xf32> to vector<16x128xf32>
    %c8 = arith.constant 8 : index
    %c0_14 = arith.constant 0 : index
    %28 = vector.load %arg3[%c8, %c0_14] : memref<9x128xf32, #tpu.memory_space<vmem>>, vector<1x128xf32>
    %29 = vector.shape_cast %28 : vector<1x128xf32> to vector<1x128xf32>
    %30 = vector.broadcast %29 : vector<1x128xf32> to vector<16x128xf32>
    %c1_15 = arith.constant 1 : index
    %c0_16 = arith.constant 0 : index
    %31 = vector.load %arg5[%c1_15, %c0_16] : memref<36x896xf32, #tpu.memory_space<vmem>>, vector<16x128xf32>
    %cst_17 = arith.constant 0xFF800000 : f32
    %32 = vector.broadcast %cst_17 : f32 to vector<16x128xf32>
    %c0_18 = arith.constant 0 : index
    %c128 = arith.constant 128 : index
    %33 = vector.load %arg5[%c0_18, %c128] : memref<36x896xf32, #tpu.memory_space<vmem>>, vector<16x128xf32>
    %34 = arith.addf %33, %6 : vector<16x128xf32>
    %35 = arith.mulf %31, %34 : vector<16x128xf32>
    %36 = arith.maximumf %32, %35 : vector<16x128xf32>
    %c0_19 = arith.constant 0 : index
    %c256 = arith.constant 256 : index
    %37 = vector.load %arg5[%c0_19, %c256] : memref<36x896xf32, #tpu.memory_space<vmem>>, vector<16x128xf32>
    %38 = arith.addf %37, %9 : vector<16x128xf32>
    %39 = arith.mulf %31, %38 : vector<16x128xf32>
    %40 = arith.maximumf %36, %39 : vector<16x128xf32>
    %c0_20 = arith.constant 0 : index
    %c384 = arith.constant 384 : index
    %41 = vector.load %arg5[%c0_20, %c384] : memref<36x896xf32, #tpu.memory_space<vmem>>, vector<16x128xf32>
    %42 = arith.addf %41, %12 : vector<16x128xf32>
    %43 = arith.mulf %31, %42 : vector<16x128xf32>
    %44 = arith.maximumf %40, %43 : vector<16x128xf32>
    %c1_21 = arith.constant 1 : index
    %c128_22 = arith.constant 128 : index
    %45 = vector.load %arg5[%c1_21, %c128_22] : memref<36x896xf32, #tpu.memory_space<vmem>>, vector<16x128xf32>
    %46 = arith.addf %45, %15 : vector<16x128xf32>
    %47 = arith.mulf %31, %46 : vector<16x128xf32>
    %48 = arith.maximumf %44, %47 : vector<16x128xf32>
    %c1_23 = arith.constant 1 : index
    %c256_24 = arith.constant 256 : index
    %49 = vector.load %arg5[%c1_23, %c256_24] : memref<36x896xf32, #tpu.memory_space<vmem>>, vector<16x128xf32>
    %50 = arith.addf %49, %18 : vector<16x128xf32>
    %51 = arith.mulf %31, %50 : vector<16x128xf32>
    %52 = arith.maximumf %48, %51 : vector<16x128xf32>
    %c1_25 = arith.constant 1 : index
    %c384_26 = arith.constant 384 : index
    %53 = vector.load %arg5[%c1_25, %c384_26] : memref<36x896xf32, #tpu.memory_space<vmem>>, vector<16x128xf32>
    %54 = arith.addf %53, %21 : vector<16x128xf32>
    %55 = arith.mulf %31, %54 : vector<16x128xf32>
    %56 = arith.maximumf %52, %55 : vector<16x128xf32>
    %c2_27 = arith.constant 2 : index
    %c128_28 = arith.constant 128 : index
    %57 = vector.load %arg5[%c2_27, %c128_28] : memref<36x896xf32, #tpu.memory_space<vmem>>, vector<16x128xf32>
    %58 = arith.addf %57, %24 : vector<16x128xf32>
    %59 = arith.mulf %31, %58 : vector<16x128xf32>
    %60 = arith.maximumf %56, %59 : vector<16x128xf32>
    %c2_29 = arith.constant 2 : index
    %c256_30 = arith.constant 256 : index
    %61 = vector.load %arg5[%c2_29, %c256_30] : memref<36x896xf32, #tpu.memory_space<vmem>>, vector<16x128xf32>
    %62 = arith.addf %61, %27 : vector<16x128xf32>
    %63 = arith.mulf %31, %62 : vector<16x128xf32>
    %64 = arith.maximumf %60, %63 : vector<16x128xf32>
    %c2_31 = arith.constant 2 : index
    %c384_32 = arith.constant 384 : index
    %65 = vector.load %arg5[%c2_31, %c384_32] : memref<36x896xf32, #tpu.memory_space<vmem>>, vector<16x128xf32>
    %66 = arith.addf %65, %30 : vector<16x128xf32>
    %67 = arith.mulf %31, %66 : vector<16x128xf32>
    %68 = arith.maximumf %64, %67 : vector<16x128xf32>
    %cst_33 = arith.constant 0.000000e+00 : f32
    %69 = vector.broadcast %cst_33 : f32 to vector<16x128xf32>
    %cst_34 = arith.constant 0.000000e+00 : f32
    %70 = vector.broadcast %cst_34 : f32 to vector<16x128xf32>
    %c0_35 = arith.constant 0 : index
    %c128_36 = arith.constant 128 : index
    %71 = vector.load %arg5[%c0_35, %c128_36] : memref<36x896xf32, #tpu.memory_space<vmem>>, vector<16x128xf32>
    %72 = arith.addf %71, %6 : vector<16x128xf32>
    %73 = arith.mulf %31, %72 : vector<16x128xf32>
    %74 = arith.subf %73, %68 : vector<16x128xf32>
    %75 = math.exp %74 : vector<16x128xf32>
    %76 = arith.addf %69, %75 : vector<16x128xf32>
    %c0_37 = arith.constant 0 : index
    %c512 = arith.constant 512 : index
    %77 = vector.load %arg5[%c0_37, %c512] : memref<36x896xf32, #tpu.memory_space<vmem>>, vector<16x128xf32>
    %78 = arith.mulf %75, %77 : vector<16x128xf32>
    %79 = arith.addf %70, %78 : vector<16x128xf32>
    %c0_38 = arith.constant 0 : index
    %c256_39 = arith.constant 256 : index
    %80 = vector.load %arg5[%c0_38, %c256_39] : memref<36x896xf32, #tpu.memory_space<vmem>>, vector<16x128xf32>
    %81 = arith.addf %80, %9 : vector<16x128xf32>
    %82 = arith.mulf %31, %81 : vector<16x128xf32>
    %83 = arith.subf %82, %68 : vector<16x128xf32>
    %84 = math.exp %83 : vector<16x128xf32>
    %85 = arith.addf %76, %84 : vector<16x128xf32>
    %c0_40 = arith.constant 0 : index
    %c640 = arith.constant 640 : index
    %86 = vector.load %arg5[%c0_40, %c640] : memref<36x896xf32, #tpu.memory_space<vmem>>, vector<16x128xf32>
    %87 = arith.mulf %84, %86 : vector<16x128xf32>
    %88 = arith.addf %79, %87 : vector<16x128xf32>
    %c0_41 = arith.constant 0 : index
    %c384_42 = arith.constant 384 : index
    %89 = vector.load %arg5[%c0_41, %c384_42] : memref<36x896xf32, #tpu.memory_space<vmem>>, vector<16x128xf32>
    %90 = arith.addf %89, %12 : vector<16x128xf32>
    %91 = arith.mulf %31, %90 : vector<16x128xf32>
    %92 = arith.subf %91, %68 : vector<16x128xf32>
    %93 = math.exp %92 : vector<16x128xf32>
    %94 = arith.addf %85, %93 : vector<16x128xf32>
    %c0_43 = arith.constant 0 : index
    %c768 = arith.constant 768 : index
    %95 = vector.load %arg5[%c0_43, %c768] : memref<36x896xf32, #tpu.memory_space<vmem>>, vector<16x128xf32>
    %96 = arith.mulf %93, %95 : vector<16x128xf32>
    %97 = arith.addf %88, %96 : vector<16x128xf32>
    %c1_44 = arith.constant 1 : index
    %c128_45 = arith.constant 128 : index
    %98 = vector.load %arg5[%c1_44, %c128_45] : memref<36x896xf32, #tpu.memory_space<vmem>>, vector<16x128xf32>
    %99 = arith.addf %98, %15 : vector<16x128xf32>
    %100 = arith.mulf %31, %99 : vector<16x128xf32>
    %101 = arith.subf %100, %68 : vector<16x128xf32>
    %102 = math.exp %101 : vector<16x128xf32>
    %103 = arith.addf %94, %102 : vector<16x128xf32>
    %c1_46 = arith.constant 1 : index
    %c512_47 = arith.constant 512 : index
    %104 = vector.load %arg5[%c1_46, %c512_47] : memref<36x896xf32, #tpu.memory_space<vmem>>, vector<16x128xf32>
    %105 = arith.mulf %102, %104 : vector<16x128xf32>
    %106 = arith.addf %97, %105 : vector<16x128xf32>
    %c1_48 = arith.constant 1 : index
    %c256_49 = arith.constant 256 : index
    %107 = vector.load %arg5[%c1_48, %c256_49] : memref<36x896xf32, #tpu.memory_space<vmem>>, vector<16x128xf32>
    %108 = arith.addf %107, %18 : vector<16x128xf32>
    %109 = arith.mulf %31, %108 : vector<16x128xf32>
    %110 = arith.subf %109, %68 : vector<16x128xf32>
    %111 = math.exp %110 : vector<16x128xf32>
    %112 = arith.addf %103, %111 : vector<16x128xf32>
    %c1_50 = arith.constant 1 : index
    %c640_51 = arith.constant 640 : index
    %113 = vector.load %arg5[%c1_50, %c640_51] : memref<36x896xf32, #tpu.memory_space<vmem>>, vector<16x128xf32>
    %114 = arith.mulf %111, %113 : vector<16x128xf32>
    %115 = arith.addf %106, %114 : vector<16x128xf32>
    %c1_52 = arith.constant 1 : index
    %c384_53 = arith.constant 384 : index
    %116 = vector.load %arg5[%c1_52, %c384_53] : memref<36x896xf32, #tpu.memory_space<vmem>>, vector<16x128xf32>
    %117 = arith.addf %116, %21 : vector<16x128xf32>
    %118 = arith.mulf %31, %117 : vector<16x128xf32>
    %119 = arith.subf %118, %68 : vector<16x128xf32>
    %120 = math.exp %119 : vector<16x128xf32>
    %121 = arith.addf %112, %120 : vector<16x128xf32>
    %c1_54 = arith.constant 1 : index
    %c768_55 = arith.constant 768 : index
    %122 = vector.load %arg5[%c1_54, %c768_55] : memref<36x896xf32, #tpu.memory_space<vmem>>, vector<16x128xf32>
    %123 = arith.mulf %120, %122 : vector<16x128xf32>
    %124 = arith.addf %115, %123 : vector<16x128xf32>
    %c2_56 = arith.constant 2 : index
    %c128_57 = arith.constant 128 : index
    %125 = vector.load %arg5[%c2_56, %c128_57] : memref<36x896xf32, #tpu.memory_space<vmem>>, vector<16x128xf32>
    %126 = arith.addf %125, %24 : vector<16x128xf32>
    %127 = arith.mulf %31, %126 : vector<16x128xf32>
    %128 = arith.subf %127, %68 : vector<16x128xf32>
    %129 = math.exp %128 : vector<16x128xf32>
    %130 = arith.addf %121, %129 : vector<16x128xf32>
    %c2_58 = arith.constant 2 : index
    %c512_59 = arith.constant 512 : index
    %131 = vector.load %arg5[%c2_58, %c512_59] : memref<36x896xf32, #tpu.memory_space<vmem>>, vector<16x128xf32>
    %132 = arith.mulf %129, %131 : vector<16x128xf32>
    %133 = arith.addf %124, %132 : vector<16x128xf32>
    %c2_60 = arith.constant 2 : index
    %c256_61 = arith.constant 256 : index
    %134 = vector.load %arg5[%c2_60, %c256_61] : memref<36x896xf32, #tpu.memory_space<vmem>>, vector<16x128xf32>
    %135 = arith.addf %134, %27 : vector<16x128xf32>
    %136 = arith.mulf %31, %135 : vector<16x128xf32>
    %137 = arith.subf %136, %68 : vector<16x128xf32>
    %138 = math.exp %137 : vector<16x128xf32>
    %139 = arith.addf %130, %138 : vector<16x128xf32>
    %c2_62 = arith.constant 2 : index
    %c640_63 = arith.constant 640 : index
    %140 = vector.load %arg5[%c2_62, %c640_63] : memref<36x896xf32, #tpu.memory_space<vmem>>, vector<16x128xf32>
    %141 = arith.mulf %138, %140 : vector<16x128xf32>
    %142 = arith.addf %133, %141 : vector<16x128xf32>
    %c2_64 = arith.constant 2 : index
    %c384_65 = arith.constant 384 : index
    %143 = vector.load %arg5[%c2_64, %c384_65] : memref<36x896xf32, #tpu.memory_space<vmem>>, vector<16x128xf32>
    %144 = arith.addf %143, %30 : vector<16x128xf32>
    %145 = arith.mulf %31, %144 : vector<16x128xf32>
    %146 = arith.subf %145, %68 : vector<16x128xf32>
    %147 = math.exp %146 : vector<16x128xf32>
    %148 = arith.addf %139, %147 : vector<16x128xf32>
    %c2_66 = arith.constant 2 : index
    %c768_67 = arith.constant 768 : index
    %149 = vector.load %arg5[%c2_66, %c768_67] : memref<36x896xf32, #tpu.memory_space<vmem>>, vector<16x128xf32>
    %150 = arith.mulf %147, %149 : vector<16x128xf32>
    %151 = arith.addf %142, %150 : vector<16x128xf32>
    %152 = tpu.reciprocal %148 : vector<16x128xf32> -> vector<16x128xf32>
    %153 = arith.mulf %151, %152 : vector<16x128xf32>
    %c0_68 = arith.constant 0 : index
    %c0_69 = arith.constant 0 : index
    %c0_70 = arith.constant 0 : index
    %154 = vector.load %arg4[%c0_68, %c0_69, %c0_70] : memref<2x16x128xf32, #tpu.memory_space<vmem>>, vector<1x16x128xf32>
    %155 = vector.shape_cast %154 : vector<1x16x128xf32> to vector<16x128xf32>
    %156 = vector.shape_cast %153 : vector<16x128xf32> to vector<1x16x128xf32>
    tpu.vector_store %arg4[%c0_68, %c0_69, %c0_70], %156 {strides = array<i32>} : memref<2x16x128xf32, #tpu.memory_space<vmem>>, vector<1x16x128xf32>,
    %c19 = arith.constant 19 : index
    %c0_71 = arith.constant 0 : index
    %157 = vector.load %arg5[%c19, %c0_71] : memref<36x896xf32, #tpu.memory_space<vmem>>, vector<16x128xf32>
    %cst_72 = arith.constant 0xFF800000 : f32
    %158 = vector.broadcast %cst_72 : f32 to vector<16x128xf32>
    %c18 = arith.constant 18 : index
    %c128_73 = arith.constant 128 : index
    %159 = vector.load %arg5[%c18, %c128_73] : memref<36x896xf32, #tpu.memory_space<vmem>>, vector<16x128xf32>
    %160 = arith.addf %159, %6 : vector<16x128xf32>
    %161 = arith.mulf %157, %160 : vector<16x128xf32>
    %162 = arith.maximumf %158, %161 : vector<16x128xf32>
    %c18_74 = arith.constant 18 : index
    %c256_75 = arith.constant 256 : index
    %163 = vector.load %arg5[%c18_74, %c256_75] : memref<36x896xf32, #tpu.memory_space<vmem>>, vector<16x128xf32>
    %164 = arith.addf %163, %9 : vector<16x128xf32>
    %165 = arith.mulf %157, %164 : vector<16x128xf32>
    %166 = arith.maximumf %162, %165 : vector<16x128xf32>
    %c18_76 = arith.constant 18 : index
    %c384_77 = arith.constant 384 : index
    %167 = vector.load %arg5[%c18_76, %c384_77] : memref<36x896xf32, #tpu.memory_space<vmem>>, vector<16x128xf32>
    %168 = arith.addf %167, %12 : vector<16x128xf32>
    %169 = arith.mulf %157, %168 : vector<16x128xf32>
    %170 = arith.maximumf %166, %169 : vector<16x128xf32>
    %c19_78 = arith.constant 19 : index
    %c128_79 = arith.constant 128 : index
    %171 = vector.load %arg5[%c19_78, %c128_79] : memref<36x896xf32, #tpu.memory_space<vmem>>, vector<16x128xf32>
    %172 = arith.addf %171, %15 : vector<16x128xf32>
    %173 = arith.mulf %157, %172 : vector<16x128xf32>
    %174 = arith.maximumf %170, %173 : vector<16x128xf32>
    %c19_80 = arith.constant 19 : index
    %c256_81 = arith.constant 256 : index
    %175 = vector.load %arg5[%c19_80, %c256_81] : memref<36x896xf32, #tpu.memory_space<vmem>>, vector<16x128xf32>
    %176 = arith.addf %175, %18 : vector<16x128xf32>
    %177 = arith.mulf %157, %176 : vector<16x128xf32>
    %178 = arith.maximumf %174, %177 : vector<16x128xf32>
    %c19_82 = arith.constant 19 : index
    %c384_83 = arith.constant 384 : index
    %179 = vector.load %arg5[%c19_82, %c384_83] : memref<36x896xf32, #tpu.memory_space<vmem>>, vector<16x128xf32>
    %180 = arith.addf %179, %21 : vector<16x128xf32>
    %181 = arith.mulf %157, %180 : vector<16x128xf32>
    %182 = arith.maximumf %178, %181 : vector<16x128xf32>
    %c20 = arith.constant 20 : index
    %c128_84 = arith.constant 128 : index
    %183 = vector.load %arg5[%c20, %c128_84] : memref<36x896xf32, #tpu.memory_space<vmem>>, vector<16x128xf32>
    %184 = arith.addf %183, %24 : vector<16x128xf32>
    %185 = arith.mulf %157, %184 : vector<16x128xf32>
    %186 = arith.maximumf %182, %185 : vector<16x128xf32>
    %c20_85 = arith.constant 20 : index
    %c256_86 = arith.constant 256 : index
    %187 = vector.load %arg5[%c20_85, %c256_86] : memref<36x896xf32, #tpu.memory_space<vmem>>, vector<16x128xf32>
    %188 = arith.addf %187, %27 : vector<16x128xf32>
    %189 = arith.mulf %157, %188 : vector<16x128xf32>
    %190 = arith.maximumf %186, %189 : vector<16x128xf32>
    %c20_87 = arith.constant 20 : index
    %c384_88 = arith.constant 384 : index
    %191 = vector.load %arg5[%c20_87, %c384_88] : memref<36x896xf32, #tpu.memory_space<vmem>>, vector<16x128xf32>
    %192 = arith.addf %191, %30 : vector<16x128xf32>
    %193 = arith.mulf %157, %192 : vector<16x128xf32>
    %194 = arith.maximumf %190, %193 : vector<16x128xf32>
    %cst_89 = arith.constant 0.000000e+00 : f32
    %195 = vector.broadcast %cst_89 : f32 to vector<16x128xf32>
    %cst_90 = arith.constant 0.000000e+00 : f32
    %196 = vector.broadcast %cst_90 : f32 to vector<16x128xf32>
    %c18_91 = arith.constant 18 : index
    %c128_92 = arith.constant 128 : index
    %197 = vector.load %arg5[%c18_91, %c128_92] : memref<36x896xf32, #tpu.memory_space<vmem>>, vector<16x128xf32>
    %198 = arith.addf %197, %6 : vector<16x128xf32>
    %199 = arith.mulf %157, %198 : vector<16x128xf32>
    %200 = arith.subf %199, %194 : vector<16x128xf32>
    %201 = math.exp %200 : vector<16x128xf32>
    %202 = arith.addf %195, %201 : vector<16x128xf32>
    %c18_93 = arith.constant 18 : index
    %c512_94 = arith.constant 512 : index
    %203 = vector.load %arg5[%c18_93, %c512_94] : memref<36x896xf32, #tpu.memory_space<vmem>>, vector<16x128xf32>
    %204 = arith.mulf %201, %203 : vector<16x128xf32>
    %205 = arith.addf %196, %204 : vector<16x128xf32>
    %c18_95 = arith.constant 18 : index
    %c256_96 = arith.constant 256 : index
    %206 = vector.load %arg5[%c18_95, %c256_96] : memref<36x896xf32, #tpu.memory_space<vmem>>, vector<16x128xf32>
    %207 = arith.addf %206, %9 : vector<16x128xf32>
    %208 = arith.mulf %157, %207 : vector<16x128xf32>
    %209 = arith.subf %208, %194 : vector<16x128xf32>
    %210 = math.exp %209 : vector<16x128xf32>
    %211 = arith.addf %202, %210 : vector<16x128xf32>
    %c18_97 = arith.constant 18 : index
    %c640_98 = arith.constant 640 : index
    %212 = vector.load %arg5[%c18_97, %c640_98] : memref<36x896xf32, #tpu.memory_space<vmem>>, vector<16x128xf32>
    %213 = arith.mulf %210, %212 : vector<16x128xf32>
    %214 = arith.addf %205, %213 : vector<16x128xf32>
    %c18_99 = arith.constant 18 : index
    %c384_100 = arith.constant 384 : index
    %215 = vector.load %arg5[%c18_99, %c384_100] : memref<36x896xf32, #tpu.memory_space<vmem>>, vector<16x128xf32>
    %216 = arith.addf %215, %12 : vector<16x128xf32>
    %217 = arith.mulf %157, %216 : vector<16x128xf32>
    %218 = arith.subf %217, %194 : vector<16x128xf32>
    %219 = math.exp %218 : vector<16x128xf32>
    %220 = arith.addf %211, %219 : vector<16x128xf32>
    %c18_101 = arith.constant 18 : index
    %c768_102 = arith.constant 768 : index
    %221 = vector.load %arg5[%c18_101, %c768_102] : memref<36x896xf32, #tpu.memory_space<vmem>>, vector<16x128xf32>
    %222 = arith.mulf %219, %221 : vector<16x128xf32>
    %223 = arith.addf %214, %222 : vector<16x128xf32>
    %c19_103 = arith.constant 19 : index
    %c128_104 = arith.constant 128 : index
    %224 = vector.load %arg5[%c19_103, %c128_104] : memref<36x896xf32, #tpu.memory_space<vmem>>, vector<16x128xf32>
    %225 = arith.addf %224, %15 : vector<16x128xf32>
    %226 = arith.mulf %157, %225 : vector<16x128xf32>
    %227 = arith.subf %226, %194 : vector<16x128xf32>
    %228 = math.exp %227 : vector<16x128xf32>
    %229 = arith.addf %220, %228 : vector<16x128xf32>
    %c19_105 = arith.constant 19 : index
    %c512_106 = arith.constant 512 : index
    %230 = vector.load %arg5[%c19_105, %c512_106] : memref<36x896xf32, #tpu.memory_space<vmem>>, vector<16x128xf32>
    %231 = arith.mulf %228, %230 : vector<16x128xf32>
    %232 = arith.addf %223, %231 : vector<16x128xf32>
    %c19_107 = arith.constant 19 : index
    %c256_108 = arith.constant 256 : index
    %233 = vector.load %arg5[%c19_107, %c256_108] : memref<36x896xf32, #tpu.memory_space<vmem>>, vector<16x128xf32>
    %234 = arith.addf %233, %18 : vector<16x128xf32>
    %235 = arith.mulf %157, %234 : vector<16x128xf32>
    %236 = arith.subf %235, %194 : vector<16x128xf32>
    %237 = math.exp %236 : vector<16x128xf32>
    %238 = arith.addf %229, %237 : vector<16x128xf32>
    %c19_109 = arith.constant 19 : index
    %c640_110 = arith.constant 640 : index
    %239 = vector.load %arg5[%c19_109, %c640_110] : memref<36x896xf32, #tpu.memory_space<vmem>>, vector<16x128xf32>
    %240 = arith.mulf %237, %239 : vector<16x128xf32>
    %241 = arith.addf %232, %240 : vector<16x128xf32>
    %c19_111 = arith.constant 19 : index
    %c384_112 = arith.constant 384 : index
    %242 = vector.load %arg5[%c19_111, %c384_112] : memref<36x896xf32, #tpu.memory_space<vmem>>, vector<16x128xf32>
    %243 = arith.addf %242, %21 : vector<16x128xf32>
    %244 = arith.mulf %157, %243 : vector<16x128xf32>
    %245 = arith.subf %244, %194 : vector<16x128xf32>
    %246 = math.exp %245 : vector<16x128xf32>
    %247 = arith.addf %238, %246 : vector<16x128xf32>
    %c19_113 = arith.constant 19 : index
    %c768_114 = arith.constant 768 : index
    %248 = vector.load %arg5[%c19_113, %c768_114] : memref<36x896xf32, #tpu.memory_space<vmem>>, vector<16x128xf32>
    %249 = arith.mulf %246, %248 : vector<16x128xf32>
    %250 = arith.addf %241, %249 : vector<16x128xf32>
    %c20_115 = arith.constant 20 : index
    %c128_116 = arith.constant 128 : index
    %251 = vector.load %arg5[%c20_115, %c128_116] : memref<36x896xf32, #tpu.memory_space<vmem>>, vector<16x128xf32>
    %252 = arith.addf %251, %24 : vector<16x128xf32>
    %253 = arith.mulf %157, %252 : vector<16x128xf32>
    %254 = arith.subf %253, %194 : vector<16x128xf32>
    %255 = math.exp %254 : vector<16x128xf32>
    %256 = arith.addf %247, %255 : vector<16x128xf32>
    %c20_117 = arith.constant 20 : index
    %c512_118 = arith.constant 512 : index
    %257 = vector.load %arg5[%c20_117, %c512_118] : memref<36x896xf32, #tpu.memory_space<vmem>>, vector<16x128xf32>
    %258 = arith.mulf %255, %257 : vector<16x128xf32>
    %259 = arith.addf %250, %258 : vector<16x128xf32>
    %c20_119 = arith.constant 20 : index
    %c256_120 = arith.constant 256 : index
    %260 = vector.load %arg5[%c20_119, %c256_120] : memref<36x896xf32, #tpu.memory_space<vmem>>, vector<16x128xf32>
    %261 = arith.addf %260, %27 : vector<16x128xf32>
    %262 = arith.mulf %157, %261 : vector<16x128xf32>
    %263 = arith.subf %262, %194 : vector<16x128xf32>
    %264 = math.exp %263 : vector<16x128xf32>
    %265 = arith.addf %256, %264 : vector<16x128xf32>
    %c20_121 = arith.constant 20 : index
    %c640_122 = arith.constant 640 : index
    %266 = vector.load %arg5[%c20_121, %c640_122] : memref<36x896xf32, #tpu.memory_space<vmem>>, vector<16x128xf32>
    %267 = arith.mulf %264, %266 : vector<16x128xf32>
    %268 = arith.addf %259, %267 : vector<16x128xf32>
    %c20_123 = arith.constant 20 : index
    %c384_124 = arith.constant 384 : index
    %269 = vector.load %arg5[%c20_123, %c384_124] : memref<36x896xf32, #tpu.memory_space<vmem>>, vector<16x128xf32>
    %270 = arith.addf %269, %30 : vector<16x128xf32>
    %271 = arith.mulf %157, %270 : vector<16x128xf32>
    %272 = arith.subf %271, %194 : vector<16x128xf32>
    %273 = math.exp %272 : vector<16x128xf32>
    %274 = arith.addf %265, %273 : vector<16x128xf32>
    %c20_125 = arith.constant 20 : index
    %c768_126 = arith.constant 768 : index
    %275 = vector.load %arg5[%c20_125, %c768_126] : memref<36x896xf32, #tpu.memory_space<vmem>>, vector<16x128xf32>
    %276 = arith.mulf %273, %275 : vector<16x128xf32>
    %277 = arith.addf %268, %276 : vector<16x128xf32>
    %278 = tpu.reciprocal %274 : vector<16x128xf32> -> vector<16x128xf32>
    %279 = arith.mulf %277, %278 : vector<16x128xf32>
    %c1_127 = arith.constant 1 : index
    %c0_128 = arith.constant 0 : index
    %c0_129 = arith.constant 0 : index
    %280 = vector.load %arg4[%c1_127, %c0_128, %c0_129] : memref<2x16x128xf32, #tpu.memory_space<vmem>>, vector<1x16x128xf32>
    %281 = vector.shape_cast %280 : vector<1x16x128xf32> to vector<16x128xf32>
    %282 = vector.shape_cast %279 : vector<16x128xf32> to vector<1x16x128xf32>
    tpu.vector_store %arg4[%c1_127, %c0_128, %c0_129], %282 {strides = array<i32>} : memref<2x16x128xf32, #tpu.memory_space<vmem>>, vector<1x16x128xf32>,
    return
  }
  func.func @transform_0(%arg0: i32) -> (i32, i32) {
    %c0_i32 = arith.constant 0 : i32
    %c0_i32_0 = arith.constant 0 : i32
    return %arg0, %c0_i32 : i32, i32
  }
  func.func @transform_1(%arg0: i32) -> (i32, i32) {
    %c0_i32 = arith.constant 0 : i32
    %c0_i32_0 = arith.constant 0 : i32
    %c0_i32_1 = arith.constant 0 : i32
    return %c0_i32, %c0_i32_0 : i32, i32
  }
  func.func @transform_2(%arg0: i32) -> (i32, i32) {
    %c0_i32 = arith.constant 0 : i32
    %c0_i32_0 = arith.constant 0 : i32
    %c0_i32_1 = arith.constant 0 : i32
    return %c0_i32, %c0_i32_0 : i32, i32
  }
  func.func @transform_3(%arg0: i32) -> (i32, i32, i32) {
    %c0_i32 = arith.constant 0 : i32
    %c0_i32_0 = arith.constant 0 : i32
    %c0_i32_1 = arith.constant 0 : i32
    return %arg0, %c0_i32, %c0_i32_0 : i32, i32, i32
  }
}

</mosaic_0001>

<llo_original>
// kernel: tpu_custom_call.1
$region0: #{tpu_custom_call.1}
  #allocation0 [shape = 'u32[]', space=smem, size = 0x4, offset = 0x4, fixed_abs, tag = 'smem constant byte address 0x4 - core index']
  #allocation1 [shape = 'u32[144,128]{1,0:T(1,128)}', space=vmem, size = 0x12000, scoped, tag = 'internal scratch']
  #allocation2 [shape = 'f32[36,896]{1,0:T(8,128)}', space=vmem, size = 0x23000, scoped, tag = 'scratch operand']
  %s0 = inlined_call_operand.hbm [shape: f32[36,72], index: 0, kind: input, shape index: {}]
  %s1 = inlined_call_operand.hbm [shape: f32[72,896], index: 1, kind: input, shape index: {}]
  %s2 = inlined_call_operand.hbm [shape: f32[9,128], index: 2, kind: input, shape index: {}]
  %s3 = inlined_call_operand.hbm [shape: f32[2,16,128], index: 3, kind: output, shape index: {}]
  %s4 = sld [smem:[#allocation0]]
  $region34: #{tpu_custom_call.1} parent=0
    _
  %s6 = ssub.s32 1, %s4
  %s7 = scalar_select 0, %s6, %s4
  $region1: #{tpu_custom_call.1} parent=0
    #allocation3 [shape = 'u8[20480]{0}', space=vmem, size = 0x5000, scoped, tag = 'input window, operand 0, single buffered']
    #allocation4 [shape = 's32[1]{0}', space=sflag, size = 0x4, scoped, tag = 'scoped memory for tpu_custom_call.1']
    #allocation5 [shape = 's32[1]{0}', space=sflag, size = 0x4, scoped, tag = 'scoped memory for tpu_custom_call.1']
    #allocation6 [shape = 'u8[258048]{0}', space=vmem, size = 0x3f000, scoped, tag = 'input window, operand 1, single buffered']
    #allocation7 [shape = 's32[1]{0}', space=sflag, size = 0x4, scoped, tag = 'scoped memory for tpu_custom_call.1']
    #allocation8 [shape = 'u8[8192]{0}', space=vmem, size = 0x2000, scoped, tag = 'input window, operand 2, single buffered']
    #allocation9 [shape = 'u8[16384]{0}', space=vmem, size = 0x4000, scoped, tag = 'output window, operand 0, single buffered']
    %8 = vsyncpa [#allocation4], 0
    %9 = vsyncpa [#allocation7], 0
    %10 = vsyncpa [#allocation5], 0
    // Predicated region
    $region2: #{tpu_custom_call.1} parent=1 // pred_check
      _
    $region3: #{tpu_custom_call.1} parent=1 // pred_check_branch
      %12 = sbr.rel (0) target = $region5
    $region4: #{tpu_custom_call.1} parent=1 // pred_region
      %s14 = ssub.s32 640, 640
      %15 = vsyncadd [#allocation4], %s14
      %s16 = sshll.u32 [#allocation3], 4
      %s17 = int_to_ptr.vmem [resolvable:$true] %s16
      %22 = dma.hbm_to_vmem [thread:$0]  %s0, 640, %s17, [#allocation4], 128, 128, 8
    $region5: #{tpu_custom_call.1} parent=1 // pred_fallthru
      _
    // Predicated region
    $region6: #{tpu_custom_call.1} parent=1 // pred_check
      _
    $region7: #{tpu_custom_call.1} parent=1 // pred_check_branch
      %24 = sbr.rel (0) target = $region9
    $region8: #{tpu_custom_call.1} parent=1 // pred_region
      %s26 = ssub.s32 8064, 8064
      %27 = vsyncadd [#allocation7], %s26
      %s28 = sshll.u32 [#allocation6], 4
      %s29 = int_to_ptr.vmem [resolvable:$true] %s28
      %34 = dma.hbm_to_vmem [thread:$0]  %s1, 8064, %s29, [#allocation7], 896, 896, 56
    $region9: #{tpu_custom_call.1} parent=1 // pred_fallthru
      _
    // Predicated region
    $region10: #{tpu_custom_call.1} parent=1 // pred_check
      _
    $region11: #{tpu_custom_call.1} parent=1 // pred_check_branch
      %36 = sbr.rel (0) target = $region13
    $region12: #{tpu_custom_call.1} parent=1 // pred_region
      %s38 = ssub.s32 256, 256
      %39 = vsyncadd [#allocation7], %s38
      %s40 = sshll.u32 [#allocation8], 4
      %s41 = int_to_ptr.vmem [resolvable:$true] %s40
      %46 = dma.hbm_to_vmem [thread:$0]  %s2, 256, %s41, [#allocation7], 128, 128, 8
    $region13: #{tpu_custom_call.1} parent=1 // pred_fallthru
      _
    // Predicated region
    $region14: #{tpu_custom_call.1} parent=1 // pred_check
      _
    $region15: #{tpu_custom_call.1} parent=1 // pred_check_branch
      %48 = sbr.rel (0) target = $region17
    $region16: #{tpu_custom_call.1} parent=1 // pred_region
      %49 = dma.done [#allocation4], 640
    $region17: #{tpu_custom_call.1} parent=1 // pred_fallthru
      _
    // Predicated region
    $region18: #{tpu_custom_call.1} parent=1 // pred_check
      _
    $region19: #{tpu_custom_call.1} parent=1 // pred_check_branch
      %51 = sbr.rel (0) target = $region21
    $region20: #{tpu_custom_call.1} parent=1 // pred_region
      %52 = dma.done [#allocation7], 8064
    $region21: #{tpu_custom_call.1} parent=1 // pred_fallthru
      _
    // Predicated region
    $region22: #{tpu_custom_call.1} parent=1 // pred_check
      _
    $region23: #{tpu_custom_call.1} parent=1 // pred_check_branch
      %54 = sbr.rel (0) target = $region25
    $region24: #{tpu_custom_call.1} parent=1 // pred_region
      %55 = dma.done [#allocation7], 256
    $region25: #{tpu_custom_call.1} parent=1 // pred_fallthru
      _
    %v56 = vld [vmem:[#allocation3] sm:$0xff]
    %v57 = vld [vmem:[#allocation3 + $0x8] sm:$0xff]
    %v58 = vld [vmem:[#allocation3 + $0x10] sm:$0xff]
    %v59 = vld [vmem:[#allocation3 + $0x18] sm:$0xff]
    %v60 = vld [vmem:[#allocation3 + $0x20] sm:$0xf]
    %v61 = vld [vmem:[#allocation6] sm:$0xff]
    %v62 = vld [vmem:[#allocation6 + $0x8] sm:$0xff]
    %v63 = vld [vmem:[#allocation6 + $0x10] sm:$0xff]
    %v64 = vld [vmem:[#allocation6 + $0x18] sm:$0xff]
    %v65 = vld [vmem:[#allocation6 + $0x20] sm:$0xff]
    %v66 = vld [vmem:[#allocation6 + $0x28] sm:$0xff]
    %v67 = vld [vmem:[#allocation6 + $0x30] sm:$0xff]
    %v68 = vld [vmem:[#allocation6 + $0x38] sm:$0xff]
    %v69 = vld [vmem:[#allocation6 + $0x40] sm:$0xff]
    %v70 = vld [vmem:[#allocation6 + $0x48] sm:$0xff]
    %v71 = vld [vmem:[#allocation6 + $0x50] sm:$0xff]
    %v72 = vld [vmem:[#allocation6 + $0x58] sm:$0xff]
    %v73 = vld [vmem:[#allocation6 + $0x60] sm:$0xff]
    %v74 = vld [vmem:[#allocation6 + $0x68] sm:$0xff]
    %v75 = vld [vmem:[#allocation6 + $0x70] sm:$0xff]
    %v76 = vld [vmem:[#allocation6 + $0x78] sm:$0xff]
    %v77 = vld [vmem:[#allocation6 + $0x80] sm:$0xff]
    %v78 = vld [vmem:[#allocation6 + $0x88] sm:$0xff]
    %v79 = vld [vmem:[#allocation6 + $0x90] sm:$0xff]
    %v80 = vld [vmem:[#allocation6 + $0x98] sm:$0xff]
    %v81 = vld [vmem:[#allocation6 + $0xa0] sm:$0xff]
    %v82 = vld [vmem:[#allocation6 + $0xa8] sm:$0xff]
    %v83 = vld [vmem:[#allocation6 + $0xb0] sm:$0xff]
    %v84 = vld [vmem:[#allocation6 + $0xb8] sm:$0xff]
    %v85 = vld [vmem:[#allocation6 + $0xc0] sm:$0xff]
    %v86 = vld [vmem:[#allocation6 + $0xc8] sm:$0xff]
    %v87 = vld [vmem:[#allocation6 + $0xd0] sm:$0xff]
    %v88 = vld [vmem:[#allocation6 + $0xd8] sm:$0xff]
    %v89 = vld [vmem:[#allocation6 + $0xe0] sm:$0xff]
    %v90 = vld [vmem:[#allocation6 + $0xe8] sm:$0xff]
    %v91 = vld [vmem:[#allocation6 + $0xf0] sm:$0xff]
    %v92 = vld [vmem:[#allocation6 + $0xf8] sm:$0xff]
    %v93 = vld [vmem:[#allocation6 + $0x100] sm:$0xff]
    %v94 = vld [vmem:[#allocation6 + $0x108] sm:$0xff]
    %v95 = vld [vmem:[#allocation6 + $0x110] sm:$0xff]
    %v96 = vld [vmem:[#allocation6 + $0x118] sm:$0xff]
    %v97 = vld [vmem:[#allocation6 + $0x120] sm:$0xff]
    %v98 = vld [vmem:[#allocation6 + $0x128] sm:$0xff]
    %v99 = vld [vmem:[#allocation6 + $0x130] sm:$0xff]
    %v100 = vld [vmem:[#allocation6 + $0x138] sm:$0xff]
    %v101 = vld [vmem:[#allocation6 + $0x140] sm:$0xff]
    %v102 = vld [vmem:[#allocation6 + $0x148] sm:$0xff]
    %v103 = vld [vmem:[#allocation6 + $0x150] sm:$0xff]
    %v104 = vld [vmem:[#allocation6 + $0x158] sm:$0xff]
    %v105 = vld [vmem:[#allocation6 + $0x160] sm:$0xff]
    %v106 = vld [vmem:[#allocation6 + $0x168] sm:$0xff]
    %v107 = vld [vmem:[#allocation6 + $0x170] sm:$0xff]
    %v108 = vld [vmem:[#allocation6 + $0x178] sm:$0xff]
    %v109 = vld [vmem:[#allocation6 + $0x180] sm:$0xff]
    %v110 = vld [vmem:[#allocation6 + $0x188] sm:$0xff]
    %v111 = vld [vmem:[#allocation6 + $0x190] sm:$0xff]
    %v112 = vld [vmem:[#allocation6 + $0x198] sm:$0xff]
    %v113 = vld [vmem:[#allocation6 + $0x1a0] sm:$0xff]
    %v114 = vld [vmem:[#allocation6 + $0x1a8] sm:$0xff]
    %v115 = vld [vmem:[#allocation6 + $0x1b0] sm:$0xff]
    %v116 = vld [vmem:[#allocation6 + $0x1b8] sm:$0xff]
    %v117 = vld [vmem:[#allocation6 + $0x1c0] sm:$0xff]
    %v118 = vld [vmem:[#allocation6 + $0x1c8] sm:$0xff]
    %v119 = vld [vmem:[#allocation6 + $0x1d0] sm:$0xff]
    %v120 = vld [vmem:[#allocation6 + $0x1d8] sm:$0xff]
    %v121 = vld [vmem:[#allocation6 + $0x1e0] sm:$0xff]
    %v122 = vld [vmem:[#allocation6 + $0x1e8] sm:$0xff]
    %v123 = vld [vmem:[#allocation6 + $0x1f0] sm:$0xff]
    %vm124 = vcmask 588800
    %v126 = vsel %vm124, %v56, 0
    %v129 = vsel %vm124, %v57, 0
    %v132 = vsel %vm124, %v58, 0
    %v135 = vsel %vm124, %v59, 0
    %v138 = vsel %vm124, %v60, 0
    %140 = vmatprep.subr.mxu0 0.0
    %141 = vmatpush1.msra.mxu0 0.0
    %142 = vmatprep.subr.mxu0 0.0
    %143 = vmatpush1.msra.mxu0 0.0
    %144 = vmatprep.subr.mxu0 0.0
    %145 = vmatpush1.msra.mxu0 0.0
    %146 = vmatprep.subr.mxu0 0.0
    %147 = vmatpush1.msra.mxu0 0.0
    %148 = vmatprep.subr.mxu0 0.0
    %149 = vmatpush1.msra.mxu0 0.0
    %150 = vmatprep.subr.mxu0 0.0
    %151 = vmatpush1.msra.mxu0 0.0
    %152 = vmatprep.subr.mxu0 0.0
    %153 = vmatpush1.msra.mxu0 0.0
    %154 = vmatprep.subr.mxu0 %v118
    %155 = vmatpush1.msra.mxu0 %v117
    %156 = vmatprep.subr.mxu0 %v111
    %157 = vmatpush1.msra.mxu0 %v110
    %158 = vmatprep.subr.mxu0 %v104
    %159 = vmatpush1.msra.mxu0 %v103
    %160 = vmatprep.subr.mxu0 %v97
    %161 = vmatpush1.msra.mxu0 %v96
    %162 = vmatprep.subr.mxu0 %v90
    %163 = vmatpush1.msra.mxu0 %v89
    %164 = vmatprep.subr.mxu0 %v83
    %165 = vmatpush1.msra.mxu0 %v82
    %166 = vmatprep.subr.mxu0 %v76
    %167 = vmatpush1.msra.mxu0 %v75
    %168 = vmatprep.subr.mxu0 %v69
    %169 = vmatpush1.msra.mxu0 %v68
    %170 = vmatprep.subr.mxu0 %v62
    %171 = vmatpush1.msra.mxu0 %v61
    %172 = vmatprep.subr.mxu0 0.0
    %173 = vmatpush2.msra.mxu0 0.0
    %174 = vmatprep.subr.mxu0 0.0
    %175 = vmatpush2.msra.mxu0 0.0
    %176 = vmatprep.subr.mxu0 0.0
    %177 = vmatpush2.msra.mxu0 0.0
    %178 = vmatprep.subr.mxu0 0.0
    %179 = vmatpush2.msra.mxu0 0.0
    %180 = vmatprep.subr.mxu0 0.0
    %181 = vmatpush2.msra.mxu0 0.0
    %182 = vmatprep.subr.mxu0 0.0
    %183 = vmatpush2.msra.mxu0 0.0
    %184 = vmatprep.subr.mxu0 0.0
    %185 = vmatpush2.msra.mxu0 0.0
    %186 = vmatprep.subr.mxu0 0.0
    %187 = vmatpush2.msra.mxu0 0.0
    %188 = vmatprep.subr.mxu0 0.0
    %189 = vmatpush2.msra.mxu0 0.0
    %190 = vmatprep.subr.mxu0 0.0
    %191 = vmatpush2.msra.mxu0 0.0
    %192 = vmatprep.subr.mxu0 0.0
    %193 = vmatpush2.msra.mxu0 0.0
    %194 = vmatprep.subr.mxu0 0.0
    %195 = vmatpush2.msra.mxu0 0.0
    %196 = vmatprep.subr.mxu0 0.0
    %197 = vmatpush2.msra.mxu0 0.0
    %198 = vmatprep.subr.mxu0 0.0
    %199 = vmatpush2.msra.mxu0 0.0
    %200 = vmatprep.subr.mxu0 0.0
    %201 = vmatpush2.msra.mxu0 0.0
    %202 = vmatprep.subr.mxu0 0.0
    %203 = vmatpush2.msra.mxu0 0.0
    %204 = vmatprep.mubr.f32.mxu0 0.0
    %205 = vmatmul.mubr.f32.gmra.mxu0 %v126
    %v206 = vpop.f32.mrf.mxu0
    %v207 = vadd.f32 0.0, %v206
    %v208 = vpop.f32.mrf.mxu0
    %v209 = vadd.f32 0.0, %v208
    %210 = vmatprep.mubr.f32.mxu0 0.0
    %211 = vmatmul.mubr.f32.gmra.mxu0 %v129
    %v212 = vpop.f32.mrf.mxu0
    %v213 = vadd.f32 0.0, %v212
    %v214 = vpop.f32.mrf.mxu0
    %v215 = vadd.f32 0.0, %v214
    %216 = vmatprep.mubr.f32.mxu0 0.0
    %217 = vmatmul.mubr.f32.gmra.mxu0 %v132
    %v218 = vpop.f32.mrf.mxu0
    %v219 = vadd.f32 0.0, %v218
    %v220 = vpop.f32.mrf.mxu0
    %v221 = vadd.f32 0.0, %v220
    %222 = vmatprep.mubr.f32.mxu0 0.0
    %223 = vmatmul.mubr.f32.gmra.mxu0 %v135
    %v224 = vpop.f32.mrf.mxu0
    %v225 = vadd.f32 0.0, %v224
    %v226 = vpop.f32.mrf.mxu0
    %v227 = vadd.f32 0.0, %v226
    %228 = vmatprep.mubr.f32.mxu0 0.0
    %229 = vmatmul.mubr.f32.gmra.mxu0 %v138
    %v230 = vpop.f32.mrf.mxu0
    %v231 = vadd.f32 0.0, %v230
    %v232 = vpop.f32.mrf.mxu0
    %v233 = vadd.f32 0.0, %v232
    %234 = vdwg.mxu0
    %235 = vmatprep.subr.mxu0 0.0
    %236 = vmatpush1.msra.mxu0 0.0
    %237 = vmatprep.subr.mxu0 0.0
    %238 = vmatpush1.msra.mxu0 0.0
    %239 = vmatprep.subr.mxu0 0.0
    %240 = vmatpush1.msra.mxu0 0.0
    %241 = vmatprep.subr.mxu0 0.0
    %242 = vmatpush1.msra.mxu0 0.0
    %243 = vmatprep.subr.mxu0 0.0
    %244 = vmatpush1.msra.mxu0 0.0
    %245 = vmatprep.subr.mxu0 0.0
    %246 = vmatpush1.msra.mxu0 0.0
    %247 = vmatprep.subr.mxu0 0.0
    %248 = vmatpush1.msra.mxu0 0.0
    %249 = vmatprep.subr.mxu0 %v120
    %250 = vmatpush1.msra.mxu0 %v119
    %251 = vmatprep.subr.mxu0 %v113
    %252 = vmatpush1.msra.mxu0 %v112
    %253 = vmatprep.subr.mxu0 %v106
    %254 = vmatpush1.msra.mxu0 %v105
    %255 = vmatprep.subr.mxu0 %v99
    %256 = vmatpush1.msra.mxu0 %v98
    %257 = vmatprep.subr.mxu0 %v92
    %258 = vmatpush1.msra.mxu0 %v91
    %259 = vmatprep.subr.mxu0 %v85
    %260 = vmatpush1.msra.mxu0 %v84
    %261 = vmatprep.subr.mxu0 %v78
    %262 = vmatpush1.msra.mxu0 %v77
    %263 = vmatprep.subr.mxu0 %v71
    %264 = vmatpush1.msra.mxu0 %v70
    %265 = vmatprep.subr.mxu0 %v64
    %266 = vmatpush1.msra.mxu0 %v63
    %267 = vmatprep.subr.mxu0 0.0
    %268 = vmatpush2.msra.mxu0 0.0
    %269 = vmatprep.subr.mxu0 0.0
    %270 = vmatpush2.msra.mxu0 0.0
    %271 = vmatprep.subr.mxu0 0.0
    %272 = vmatpush2.msra.mxu0 0.0
    %273 = vmatprep.subr.mxu0 0.0
    %274 = vmatpush2.msra.mxu0 0.0
    %275 = vmatprep.subr.mxu0 0.0
    %276 = vmatpush2.msra.mxu0 0.0
    %277 = vmatprep.subr.mxu0 0.0
    %278 = vmatpush2.msra.mxu0 0.0
    %279 = vmatprep.subr.mxu0 0.0
    %280 = vmatpush2.msra.mxu0 0.0
    %281 = vmatprep.subr.mxu0 0.0
    %282 = vmatpush2.msra.mxu0 0.0
    %283 = vmatprep.subr.mxu0 0.0
    %284 = vmatpush2.msra.mxu0 0.0
    %285 = vmatprep.subr.mxu0 0.0
    %286 = vmatpush2.msra.mxu0 0.0
    %287 = vmatprep.subr.mxu0 0.0
    %288 = vmatpush2.msra.mxu0 0.0
    %289 = vmatprep.subr.mxu0 0.0
    %290 = vmatpush2.msra.mxu0 0.0
    %291 = vmatprep.subr.mxu0 0.0
    %292 = vmatpush2.msra.mxu0 0.0
    %293 = vmatprep.subr.mxu0 0.0
    %294 = vmatpush2.msra.mxu0 0.0
    %295 = vmatprep.subr.mxu0 0.0
    %296 = vmatpush2.msra.mxu0 0.0
    %297 = vmatprep.subr.mxu0 0.0
    %298 = vmatpush2.msra.mxu0 0.0
    %299 = vmatprep.mubr.f32.mxu0 0.0
    %300 = vmatmul.mubr.f32.gmra.mxu0 %v126
    %v301 = vpop.f32.mrf.mxu0
    %v302 = vadd.f32 0.0, %v301
    %v303 = vpop.f32.mrf.mxu0
    %v304 = vadd.f32 0.0, %v303
    %305 = vmatprep.mubr.f32.mxu0 0.0
    %306 = vmatmul.mubr.f32.gmra.mxu0 %v129
    %v307 = vpop.f32.mrf.mxu0
    %v308 = vadd.f32 0.0, %v307
    %v309 = vpop.f32.mrf.mxu0
    %v310 = vadd.f32 0.0, %v309
    %311 = vmatprep.mubr.f32.mxu0 0.0
    %312 = vmatmul.mubr.f32.gmra.mxu0 %v132
    %v313 = vpop.f32.mrf.mxu0
    %v314 = vadd.f32 0.0, %v313
    %v315 = vpop.f32.mrf.mxu0
    %v316 = vadd.f32 0.0, %v315
    %317 = vmatprep.mubr.f32.mxu0 0.0
    %318 = vmatmul.mubr.f32.gmra.mxu0 %v135
    %v319 = vpop.f32.mrf.mxu0
    %v320 = vadd.f32 0.0, %v319
    %v321 = vpop.f32.mrf.mxu0
    %v322 = vadd.f32 0.0, %v321
    %323 = vmatprep.mubr.f32.mxu0 0.0
    %324 = vmatmul.mubr.f32.gmra.mxu0 %v138
    %v325 = vpop.f32.mrf.mxu0
    %v326 = vadd.f32 0.0, %v325
    %v327 = vpop.f32.mrf.mxu0
    %v328 = vadd.f32 0.0, %v327
    %329 = vdwg.mxu0
    %330 = vmatprep.subr.mxu0 0.0
    %331 = vmatpush1.msra.mxu0 0.0
    %332 = vmatprep.subr.mxu0 0.0
    %333 = vmatpush1.msra.mxu0 0.0
    %334 = vmatprep.subr.mxu0 0.0
    %335 = vmatpush1.msra.mxu0 0.0
    %336 = vmatprep.subr.mxu0 0.0
    %337 = vmatpush1.msra.mxu0 0.0
    %338 = vmatprep.subr.mxu0 0.0
    %339 = vmatpush1.msra.mxu0 0.0
    %340 = vmatprep.subr.mxu0 0.0
    %341 = vmatpush1.msra.mxu0 0.0
    %342 = vmatprep.subr.mxu0 0.0
    %343 = vmatpush1.msra.mxu0 0.0
    %344 = vmatprep.subr.mxu0 %v122
    %345 = vmatpush1.msra.mxu0 %v121
    %346 = vmatprep.subr.mxu0 %v115
    %347 = vmatpush1.msra.mxu0 %v114
    %348 = vmatprep.subr.mxu0 %v108
    %349 = vmatpush1.msra.mxu0 %v107
    %350 = vmatprep.subr.mxu0 %v101
    %351 = vmatpush1.msra.mxu0 %v100
    %352 = vmatprep.subr.mxu0 %v94
    %353 = vmatpush1.msra.mxu0 %v93
    %354 = vmatprep.subr.mxu0 %v87
    %355 = vmatpush1.msra.mxu0 %v86
    %356 = vmatprep.subr.mxu0 %v80
    %357 = vmatpush1.msra.mxu0 %v79
    %358 = vmatprep.subr.mxu0 %v73
    %359 = vmatpush1.msra.mxu0 %v72
    %360 = vmatprep.subr.mxu0 %v66
    %361 = vmatpush1.msra.mxu0 %v65
    %362 = vmatprep.subr.mxu0 0.0
    %363 = vmatpush2.msra.mxu0 0.0
    %364 = vmatprep.subr.mxu0 0.0
    %365 = vmatpush2.msra.mxu0 0.0
    %366 = vmatprep.subr.mxu0 0.0
    %367 = vmatpush2.msra.mxu0 0.0
    %368 = vmatprep.subr.mxu0 0.0
    %369 = vmatpush2.msra.mxu0 0.0
    %370 = vmatprep.subr.mxu0 0.0
    %371 = vmatpush2.msra.mxu0 0.0
    %372 = vmatprep.subr.mxu0 0.0
    %373 = vmatpush2.msra.mxu0 0.0
    %374 = vmatprep.subr.mxu0 0.0
    %375 = vmatpush2.msra.mxu0 0.0
    %376 = vmatprep.subr.mxu0 0.0
    %377 = vmatpush2.msra.mxu0 0.0
    %378 = vmatprep.subr.mxu0 0.0
    %379 = vmatpush2.msra.mxu0 0.0
    %380 = vmatprep.subr.mxu0 0.0
    %381 = vmatpush2.msra.mxu0 0.0
    %382 = vmatprep.subr.mxu0 0.0
    %383 = vmatpush2.msra.mxu0 0.0
    %384 = vmatprep.subr.mxu0 0.0
    %385 = vmatpush2.msra.mxu0 0.0
    %386 = vmatprep.subr.mxu0 0.0
    %387 = vmatpush2.msra.mxu0 0.0
    %388 = vmatprep.subr.mxu0 0.0
    %389 = vmatpush2.msra.mxu0 0.0
    %390 = vmatprep.subr.mxu0 0.0
    %391 = vmatpush2.msra.mxu0 0.0
    %392 = vmatprep.subr.mxu0 0.0
    %393 = vmatpush2.msra.mxu0 0.0
    %394 = vmatprep.mubr.f32.mxu0 0.0
    %395 = vmatmul.mubr.f32.gmra.mxu0 %v126
    %v396 = vpop.f32.mrf.mxu0
    %v397 = vadd.f32 0.0, %v396
    %v398 = vpop.f32.mrf.mxu0
    %v399 = vadd.f32 0.0, %v398
    %400 = vmatprep.mubr.f32.mxu0 0.0
    %401 = vmatmul.mubr.f32.gmra.mxu0 %v129
    %v402 = vpop.f32.mrf.mxu0
    %v403 = vadd.f32 0.0, %v402
    %v404 = vpop.f32.mrf.mxu0
    %v405 = vadd.f32 0.0, %v404
    %406 = vmatprep.mubr.f32.mxu0 0.0
    %407 = vmatmul.mubr.f32.gmra.mxu0 %v132
    %v408 = vpop.f32.mrf.mxu0
    %v409 = vadd.f32 0.0, %v408
    %v410 = vpop.f32.mrf.mxu0
    %v411 = vadd.f32 0.0, %v410
    %412 = vmatprep.mubr.f32.mxu0 0.0
    %413 = vmatmul.mubr.f32.gmra.mxu0 %v135
    %v414 = vpop.f32.mrf.mxu0
    %v415 = vadd.f32 0.0, %v414
    %v416 = vpop.f32.mrf.mxu0
    %v417 = vadd.f32 0.0, %v416
    %418 = vmatprep.mubr.f32.mxu0 0.0
    %419 = vmatmul.mubr.f32.gmra.mxu0 %v138
    %v420 = vpop.f32.mrf.mxu0
    %v421 = vadd.f32 0.0, %v420
    %v422 = vpop.f32.mrf.mxu0
    %v423 = vadd.f32 0.0, %v422
    %424 = vdwg.mxu0
    %425 = vmatprep.subr.mxu0 0.0
    %426 = vmatpush1.msra.mxu0 0.0
    %427 = vmatprep.subr.mxu0 0.0
    %428 = vmatpush1.msra.mxu0 0.0
    %429 = vmatprep.subr.mxu0 0.0
    %430 = vmatpush1.msra.mxu0 0.0
    %431 = vmatprep.subr.mxu0 0.0
    %432 = vmatpush1.msra.mxu0 0.0
    %433 = vmatprep.subr.mxu0 0.0
    %434 = vmatpush1.msra.mxu0 0.0
    %435 = vmatprep.subr.mxu0 0.0
    %436 = vmatpush1.msra.mxu0 0.0
    %437 = vmatprep.subr.mxu0 0.0
    %438 = vmatpush1.msra.mxu0 0.0
    %439 = vmatprep.subr.mxu0 0.0
    %440 = vmatpush1.msra.mxu0 %v123
    %441 = vmatprep.subr.mxu0 0.0
    %442 = vmatpush1.msra.mxu0 %v116
    %443 = vmatprep.subr.mxu0 0.0
    %444 = vmatpush1.msra.mxu0 %v109
    %445 = vmatprep.subr.mxu0 0.0
    %446 = vmatpush1.msra.mxu0 %v102
    %447 = vmatprep.subr.mxu0 0.0
    %448 = vmatpush1.msra.mxu0 %v95
    %449 = vmatprep.subr.mxu0 0.0
    %450 = vmatpush1.msra.mxu0 %v88
    %451 = vmatprep.subr.mxu0 0.0
    %452 = vmatpush1.msra.mxu0 %v81
    %453 = vmatprep.subr.mxu0 0.0
    %454 = vmatpush1.msra.mxu0 %v74
    %455 = vmatprep.subr.mxu0 0.0
    %456 = vmatpush1.msra.mxu0 %v67
    %457 = vmatprep.subr.mxu0 0.0
    %458 = vmatpush2.msra.mxu0 0.0
    %459 = vmatprep.subr.mxu0 0.0
    %460 = vmatpush2.msra.mxu0 0.0
    %461 = vmatprep.subr.mxu0 0.0
    %462 = vmatpush2.msra.mxu0 0.0
    %463 = vmatprep.subr.mxu0 0.0
    %464 = vmatpush2.msra.mxu0 0.0
    %465 = vmatprep.subr.mxu0 0.0
    %466 = vmatpush2.msra.mxu0 0.0
    %467 = vmatprep.subr.mxu0 0.0
    %468 = vmatpush2.msra.mxu0 0.0
    %469 = vmatprep.subr.mxu0 0.0
    %470 = vmatpush2.msra.mxu0 0.0
    %471 = vmatprep.subr.mxu0 0.0
    %472 = vmatpush2.msra.mxu0 0.0
    %473 = vmatprep.subr.mxu0 0.0
    %474 = vmatpush2.msra.mxu0 0.0
    %475 = vmatprep.subr.mxu0 0.0
    %476 = vmatpush2.msra.mxu0 0.0
    %477 = vmatprep.subr.mxu0 0.0
    %478 = vmatpush2.msra.mxu0 0.0
    %479 = vmatprep.subr.mxu0 0.0
    %480 = vmatpush2.msra.mxu0 0.0
    %481 = vmatprep.subr.mxu0 0.0
    %482 = vmatpush2.msra.mxu0 0.0
    %483 = vmatprep.subr.mxu0 0.0
    %484 = vmatpush2.msra.mxu0 0.0
    %485 = vmatprep.subr.mxu0 0.0
    %486 = vmatpush2.msra.mxu0 0.0
    %487 = vmatprep.subr.mxu0 0.0
    %488 = vmatpush2.msra.mxu0 0.0
    %489 = vmatprep.mubr.f32.mxu0 0.0
    %490 = vmatmul.mubr.f32.gmra.mxu0 %v126
    %v491 = vpop.f32.mrf.mxu0
    %v492 = vadd.f32 0.0, %v491
    %v493 = vpop.f32.mrf.mxu0
    %494 = vmatprep.mubr.f32.mxu0 0.0
    %495 = vmatmul.mubr.f32.gmra.mxu0 %v129
    %v496 = vpop.f32.mrf.mxu0
    %v497 = vadd.f32 0.0, %v496
    %v498 = vpop.f32.mrf.mxu0
    %499 = vmatprep.mubr.f32.mxu0 0.0
    %500 = vmatmul.mubr.f32.gmra.mxu0 %v132
    %v501 = vpop.f32.mrf.mxu0
    %v502 = vadd.f32 0.0, %v501
    %v503 = vpop.f32.mrf.mxu0
    %504 = vmatprep.mubr.f32.mxu0 0.0
    %505 = vmatmul.mubr.f32.gmra.mxu0 %v135
    %v506 = vpop.f32.mrf.mxu0
    %v507 = vadd.f32 0.0, %v506
    %v508 = vpop.f32.mrf.mxu0
    %509 = vmatprep.mubr.f32.mxu0 0.0
    %510 = vmatmul.mubr.f32.gmra.mxu0 %v138
    %v511 = vpop.f32.mrf.mxu0
    %v512 = vadd.f32 0.0, %v511
    %v513 = vpop.f32.mrf.mxu0
    %514 = vdwg.mxu0
    %515 = vst [vmem:[#allocation2] sm:$0xff] %v207
    %516 = vst [vmem:[#allocation2 + $0x8] sm:$0xff] %v209
    %517 = vst [vmem:[#allocation2 + $0x10] sm:$0xff] %v302
    %518 = vst [vmem:[#allocation2 + $0x18] sm:$0xff] %v304
    %519 = vst [vmem:[#allocation2 + $0x20] sm:$0xff] %v397
    %520 = vst [vmem:[#allocation2 + $0x28] sm:$0xff] %v399
    %521 = vst [vmem:[#allocation2 + $0x30] sm:$0xff] %v492
    %522 = vst [vmem:[#allocation2 + $0x38] sm:$0xff] %v213
    %523 = vst [vmem:[#allocation2 + $0x40] sm:$0xff] %v215
    %524 = vst [vmem:[#allocation2 + $0x48] sm:$0xff] %v308
    %525 = vst [vmem:[#allocation2 + $0x50] sm:$0xff] %v310
    %526 = vst [vmem:[#allocation2 + $0x58] sm:$0xff] %v403
    %527 = vst [vmem:[#allocation2 + $0x60] sm:$0xff] %v405
    %528 = vst [vmem:[#allocation2 + $0x68] sm:$0xff] %v497
    %529 = vst [vmem:[#allocation2 + $0x70] sm:$0xff] %v219
    %530 = vst [vmem:[#allocation2 + $0x78] sm:$0xff] %v221
    %531 = vst [vmem:[#allocation2 + $0x80] sm:$0xff] %v314
    %532 = vst [vmem:[#allocation2 + $0x88] sm:$0xff] %v316
    %533 = vst [vmem:[#allocation2 + $0x90] sm:$0xff] %v409
    %534 = vst [vmem:[#allocation2 + $0x98] sm:$0xff] %v411
    %535 = vst [vmem:[#allocation2 + $0xa0] sm:$0xff] %v502
    %536 = vst [vmem:[#allocation2 + $0xa8] sm:$0xff] %v225
    %537 = vst [vmem:[#allocation2 + $0xb0] sm:$0xff] %v227
    %538 = vst [vmem:[#allocation2 + $0xb8] sm:$0xff] %v320
    %539 = vst [vmem:[#allocation2 + $0xc0] sm:$0xff] %v322
    %540 = vst [vmem:[#allocation2 + $0xc8] sm:$0xff] %v415
    %541 = vst [vmem:[#allocation2 + $0xd0] sm:$0xff] %v417
    %542 = vst [vmem:[#allocation2 + $0xd8] sm:$0xff] %v507
    %543 = vst [vmem:[#allocation2 + $0xe0] sm:$0xf] %v231
    %544 = vst [vmem:[#allocation2 + $0xe8] sm:$0xf] %v233
    %545 = vst [vmem:[#allocation2 + $0xf0] sm:$0xf] %v326
    %546 = vst [vmem:[#allocation2 + $0xf8] sm:$0xf] %v328
    %547 = vst [vmem:[#allocation2 + $0x100] sm:$0xf] %v421
    %548 = vst [vmem:[#allocation2 + $0x108] sm:$0xf] %v423
    %549 = vst [vmem:[#allocation2 + $0x110] sm:$0xf] %v512
    %v550 = vld [vmem:[#allocation8] sm:$0x1]
    %v551 = vlaneseq
    %v552 = vshrl.u32 %v551, 7
    %v553 = vsub.s32 0, %v552
    %v554 = vrot.slane %v550, %v553
    %v555 = vld [vmem:[#allocation8 + $0x1] sm:$0x1]
    %v556 = vlaneseq
    %v557 = vshrl.u32 %v556, 7
    %v558 = vsub.s32 0, %v557
    %v559 = vrot.slane %v555, %v558
    %v560 = vld [vmem:[#allocation8 + $0x2] sm:$0x1]
    %v561 = vlaneseq
    %v562 = vshrl.u32 %v561, 7
    %v563 = vsub.s32 0, %v562
    %v564 = vrot.slane %v560, %v563
    %v565 = vld [vmem:[#allocation8 + $0x3] sm:$0x1]
    %v566 = vlaneseq
    %v567 = vshrl.u32 %v566, 7
    %v568 = vsub.s32 0, %v567
    %v569 = vrot.slane %v565, %v568
    %v570 = vld [vmem:[#allocation8 + $0x4] sm:$0x1]
    %v571 = vlaneseq
    %v572 = vshrl.u32 %v571, 7
    %v573 = vsub.s32 0, %v572
    %v574 = vrot.slane %v570, %v573
    %v575 = vld [vmem:[#allocation8 + $0x5] sm:$0x1]
    %v576 = vlaneseq
    %v577 = vshrl.u32 %v576, 7
    %v578 = vsub.s32 0, %v577
    %v579 = vrot.slane %v575, %v578
    %v580 = vld [vmem:[#allocation8 + $0x6] sm:$0x1]
    %v581 = vlaneseq
    %v582 = vshrl.u32 %v581, 7
    %v583 = vsub.s32 0, %v582
    %v584 = vrot.slane %v580, %v583
    %v585 = vld [vmem:[#allocation8 + $0x7] sm:$0x1]
    %v586 = vlaneseq
    %v587 = vshrl.u32 %v586, 7
    %v588 = vsub.s32 0, %v587
    %v589 = vrot.slane %v585, %v588
    %v590 = vld [vmem:[#allocation8 + $0x8] sm:$0x1]
    %v591 = vlaneseq
    %v592 = vshrl.u32 %v591, 7
    %v593 = vsub.s32 0, %v592
    %v594 = vrot.slane %v590, %v593
    %v595 = vld [vmem:[#allocation2] sm:$0xfe]
    %v596 = vld [vmem:[#allocation2 + $0x38] sm:$0xff]
    %v597 = vld [vmem:[#allocation2 + $0x70] sm:$0x1]
    %v598 = vld [vmem:[#allocation2 + $0x8] sm:$0xff]
    %v599 = vld [vmem:[#allocation2 + $0x40] sm:$0xff]
    %v600 = vadd.f32 %v598, %v554
    %v601 = vadd.f32 %v599, %v554
    %vm604 = vcmask 1040384
    %v605 = vrot.slane %v600, 7
    %v606 = vrot.slane %v601, 7
    %v607 = vsel %vm604, %v605, %v606
    %v611 = vmul.f32 %v595, %v605
    %v612 = vmul.f32 %v596, %v607
    %v613 = vmul.f32 %v597, %v606
    %v614 = vld [vmem:[#allocation2 + $0x10] sm:$0xff]
    %v615 = vld [vmem:[#allocation2 + $0x48] sm:$0xff]
    %v616 = vadd.f32 %v614, %v559
    %v617 = vadd.f32 %v615, %v559
    %v620 = vrot.slane %v616, 7
    %v621 = vrot.slane %v617, 7
    %v622 = vsel %vm604, %v620, %v621
    %v626 = vmul.f32 %v595, %v620
    %v627 = vmul.f32 %v596, %v622
    %v628 = vmul.f32 %v597, %v621
    %v629 = vmax.f32 %v611, %v626
    %v630 = vmax.f32 %v612, %v627
    %v631 = vmax.f32 %v613, %v628
    %v632 = vld [vmem:[#allocation2 + $0x18] sm:$0xff]
    %v633 = vld [vmem:[#allocation2 + $0x50] sm:$0xff]
    %v634 = vadd.f32 %v632, %v564
    %v635 = vadd.f32 %v633, %v564
    %v638 = vrot.slane %v634, 7
    %v639 = vrot.slane %v635, 7
    %v640 = vsel %vm604, %v638, %v639
    %v644 = vmul.f32 %v595, %v638
    %v645 = vmul.f32 %v596, %v640
    %v646 = vmul.f32 %v597, %v639
    %v647 = vmax.f32 %v629, %v644
    %v648 = vmax.f32 %v630, %v645
    %v649 = vmax.f32 %v631, %v646
    %v650 = vld [vmem:[#allocation2 + $0x8] sm:$0xfe]
    %v651 = vld [vmem:[#allocation2 + $0x78] sm:$0x1]
    %v652 = vadd.f32 %v650, %v569
    %v653 = vadd.f32 %v599, %v569
    %v654 = vadd.f32 %v651, %v569
    %v655 = vmul.f32 %v595, %v652
    %v656 = vmul.f32 %v596, %v653
    %v657 = vmul.f32 %v597, %v654
    %v658 = vmax.f32 %v647, %v655
    %v659 = vmax.f32 %v648, %v656
    %v660 = vmax.f32 %v649, %v657
    %v661 = vld [vmem:[#allocation2 + $0x10] sm:$0xfe]
    %v662 = vld [vmem:[#allocation2 + $0x80] sm:$0x1]
    %v663 = vadd.f32 %v661, %v574
    %v664 = vadd.f32 %v615, %v574
    %v665 = vadd.f32 %v662, %v574
    %v666 = vmul.f32 %v595, %v663
    %v667 = vmul.f32 %v596, %v664
    %v668 = vmul.f32 %v597, %v665
    %v669 = vmax.f32 %v658, %v666
    %v670 = vmax.f32 %v659, %v667
    %v671 = vmax.f32 %v660, %v668
    %v672 = vld [vmem:[#allocation2 + $0x18] sm:$0xfe]
    %v673 = vld [vmem:[#allocation2 + $0x88] sm:$0x1]
    %v674 = vadd.f32 %v672, %v579
    %v675 = vadd.f32 %v633, %v579
    %v676 = vadd.f32 %v673, %v579
    %v677 = vmul.f32 %v595, %v674
    %v678 = vmul.f32 %v596, %v675
    %v679 = vmul.f32 %v597, %v676
    %v680 = vmax.f32 %v669, %v677
    %v681 = vmax.f32 %v670, %v678
    %v682 = vmax.f32 %v671, %v679
    %v683 = vld [vmem:[#allocation2 + $0x8] sm:$0xfc]
    %v684 = vld [vmem:[#allocation2 + $0x78] sm:$0x3]
    %v685 = vadd.f32 %v683, %v584
    %v686 = vadd.f32 %v599, %v584
    %v687 = vadd.f32 %v684, %v584
    %vm691 = vcmask 1046528
    %v692 = vrot.slane %v685, 1
    %v693 = vrot.slane %v686, 1
    %v694 = vsel %vm691, %v692, %v693
    %v695 = vrot.slane %v687, 1
    %v696 = vsel %vm691, %v693, %v695
    %v700 = vmul.f32 %v595, %v694
    %v701 = vmul.f32 %v596, %v696
    %v702 = vmul.f32 %v597, %v695
    %v703 = vmax.f32 %v680, %v700
    %v704 = vmax.f32 %v681, %v701
    %v705 = vmax.f32 %v682, %v702
    %v706 = vld [vmem:[#allocation2 + $0x10] sm:$0xfc]
    %v707 = vld [vmem:[#allocation2 + $0x80] sm:$0x3]
    %v708 = vadd.f32 %v706, %v589
    %v709 = vadd.f32 %v615, %v589
    %v710 = vadd.f32 %v707, %v589
    %v714 = vrot.slane %v708, 1
    %v715 = vrot.slane %v709, 1
    %v716 = vsel %vm691, %v714, %v715
    %v717 = vrot.slane %v710, 1
    %v718 = vsel %vm691, %v715, %v717
    %v722 = vmul.f32 %v595, %v716
    %v723 = vmul.f32 %v596, %v718
    %v724 = vmul.f32 %v597, %v717
    %v725 = vmax.f32 %v703, %v722
    %v726 = vmax.f32 %v704, %v723
    %v727 = vmax.f32 %v705, %v724
    %v728 = vld [vmem:[#allocation2 + $0x18] sm:$0xfc]
    %v729 = vld [vmem:[#allocation2 + $0x88] sm:$0x3]
    %v730 = vadd.f32 %v728, %v594
    %v731 = vadd.f32 %v633, %v594
    %v732 = vadd.f32 %v729, %v594
    %v736 = vrot.slane %v730, 1
    %v737 = vrot.slane %v731, 1
    %v738 = vsel %vm691, %v736, %v737
    %v739 = vrot.slane %v732, 1
    %v740 = vsel %vm691, %v737, %v739
    %v744 = vmul.f32 %v595, %v738
    %v745 = vmul.f32 %v596, %v740
    %v746 = vmul.f32 %v597, %v739
    %v747 = vmax.f32 %v725, %v744
    %v748 = vmax.f32 %v726, %v745
    %v749 = vmax.f32 %v727, %v746
    %v750 = vsub.f32 %v611, %v747
    %v751 = vsub.f32 %v612, %v748
    %v752 = vsub.f32 %v613, %v749
    %v753 = vmul.f32 %v750, 1.442695
    %v754 = vpow.pop %v753
    %v755 = vmul.f32 %v751, 1.442695
    %v756 = vpow.pop %v755
    %v757 = vmul.f32 %v752, 1.442695
    %v758 = vpow.pop %v757
    %v759 = vadd.f32 %v754, 0.0
    %v760 = vadd.f32 %v756, 0.0
    %v761 = vadd.f32 %v758, 0.0
    %v762 = vld [vmem:[#allocation2 + $0x20] sm:$0xff]
    %v763 = vld [vmem:[#allocation2 + $0x58] sm:$0xff]
    %v766 = vrot.slane %v762, 7
    %v767 = vrot.slane %v763, 7
    %v768 = vsel %vm604, %v766, %v767
    %v772 = vmul.f32 %v754, %v766
    %v773 = vmul.f32 %v756, %v768
    %v774 = vmul.f32 %v758, %v767
    %v775 = vadd.f32 %v772, 0.0
    %v776 = vadd.f32 %v773, 0.0
    %v777 = vadd.f32 %v774, 0.0
    %v778 = vsub.f32 %v626, %v747
    %v779 = vsub.f32 %v627, %v748
    %v780 = vsub.f32 %v628, %v749
    %v781 = vmul.f32 %v778, 1.442695
    %v782 = vpow.pop %v781
    %v783 = vmul.f32 %v779, 1.442695
    %v784 = vpow.pop %v783
    %v785 = vmul.f32 %v780, 1.442695
    %v786 = vpow.pop %v785
    %v787 = vadd.f32 %v759, %v782
    %v788 = vadd.f32 %v760, %v784
    %v789 = vadd.f32 %v761, %v786
    %v790 = vld [vmem:[#allocation2 + $0x28] sm:$0xff]
    %v791 = vld [vmem:[#allocation2 + $0x60] sm:$0xff]
    %v794 = vrot.slane %v790, 7
    %v795 = vrot.slane %v791, 7
    %v796 = vsel %vm604, %v794, %v795
    %v800 = vmul.f32 %v782, %v794
    %v801 = vmul.f32 %v784, %v796
    %v802 = vmul.f32 %v786, %v795
    %v803 = vadd.f32 %v775, %v800
    %v804 = vadd.f32 %v776, %v801
    %v805 = vadd.f32 %v777, %v802
    %v806 = vsub.f32 %v644, %v747
    %v807 = vsub.f32 %v645, %v748
    %v808 = vsub.f32 %v646, %v749
    %v809 = vmul.f32 %v806, 1.442695
    %v810 = vpow.pop %v809
    %v811 = vmul.f32 %v807, 1.442695
    %v812 = vpow.pop %v811
    %v813 = vmul.f32 %v808, 1.442695
    %v814 = vpow.pop %v813
    %v815 = vadd.f32 %v787, %v810
    %v816 = vadd.f32 %v788, %v812
    %v817 = vadd.f32 %v789, %v814
    %v818 = vld [vmem:[#allocation2 + $0x30] sm:$0xff]
    %v819 = vld [vmem:[#allocation2 + $0x68] sm:$0xff]
    %v822 = vrot.slane %v818, 7
    %v823 = vrot.slane %v819, 7
    %v824 = vsel %vm604, %v822, %v823
    %v828 = vmul.f32 %v810, %v822
    %v829 = vmul.f32 %v812, %v824
    %v830 = vmul.f32 %v814, %v823
    %v831 = vadd.f32 %v803, %v828
    %v832 = vadd.f32 %v804, %v829
    %v833 = vadd.f32 %v805, %v830
    %v834 = vsub.f32 %v655, %v747
    %v835 = vsub.f32 %v656, %v748
    %v836 = vsub.f32 %v657, %v749
    %v837 = vmul.f32 %v834, 1.442695
    %v838 = vpow.pop %v837
    %v839 = vmul.f32 %v835, 1.442695
    %v840 = vpow.pop %v839
    %v841 = vmul.f32 %v836, 1.442695
    %v842 = vpow.pop %v841
    %v843 = vadd.f32 %v815, %v838
    %v844 = vadd.f32 %v816, %v840
    %v845 = vadd.f32 %v817, %v842
    %v846 = vld [vmem:[#allocation2 + $0x20] sm:$0xfe]
    %v847 = vld [vmem:[#allocation2 + $0x90] sm:$0x1]
    %v848 = vmul.f32 %v838, %v846
    %v849 = vmul.f32 %v840, %v763
    %v850 = vmul.f32 %v842, %v847
    %v851 = vadd.f32 %v831, %v848
    %v852 = vadd.f32 %v832, %v849
    %v853 = vadd.f32 %v833, %v850
    %v854 = vsub.f32 %v666, %v747
    %v855 = vsub.f32 %v667, %v748
    %v856 = vsub.f32 %v668, %v749
    %v857 = vmul.f32 %v854, 1.442695
    %v858 = vpow.pop %v857
    %v859 = vmul.f32 %v855, 1.442695
    %v860 = vpow.pop %v859
    %v861 = vmul.f32 %v856, 1.442695
    %v862 = vpow.pop %v861
    %v863 = vadd.f32 %v843, %v858
    %v864 = vadd.f32 %v844, %v860
    %v865 = vadd.f32 %v845, %v862
    %v866 = vld [vmem:[#allocation2 + $0x28] sm:$0xfe]
    %v867 = vld [vmem:[#allocation2 + $0x98] sm:$0x1]
    %v868 = vmul.f32 %v858, %v866
    %v869 = vmul.f32 %v860, %v791
    %v870 = vmul.f32 %v862, %v867
    %v871 = vadd.f32 %v851, %v868
    %v872 = vadd.f32 %v852, %v869
    %v873 = vadd.f32 %v853, %v870
    %v874 = vsub.f32 %v677, %v747
    %v875 = vsub.f32 %v678, %v748
    %v876 = vsub.f32 %v679, %v749
    %v877 = vmul.f32 %v874, 1.442695
    %v878 = vpow.pop %v877
    %v879 = vmul.f32 %v875, 1.442695
    %v880 = vpow.pop %v879
    %v881 = vmul.f32 %v876, 1.442695
    %v882 = vpow.pop %v881
    %v883 = vadd.f32 %v863, %v878
    %v884 = vadd.f32 %v864, %v880
    %v885 = vadd.f32 %v865, %v882
    %v886 = vld [vmem:[#allocation2 + $0x30] sm:$0xfe]
    %v887 = vld [vmem:[#allocation2 + $0xa0] sm:$0x1]
    %v888 = vmul.f32 %v878, %v886
    %v889 = vmul.f32 %v880, %v819
    %v890 = vmul.f32 %v882, %v887
    %v891 = vadd.f32 %v871, %v888
    %v892 = vadd.f32 %v872, %v889
    %v893 = vadd.f32 %v873, %v890
    %v894 = vsub.f32 %v700, %v747
    %v895 = vsub.f32 %v701, %v748
    %v896 = vsub.f32 %v702, %v749
    %v897 = vmul.f32 %v894, 1.442695
    %v898 = vpow.pop %v897
    %v899 = vmul.f32 %v895, 1.442695
    %v900 = vpow.pop %v899
    %v901 = vmul.f32 %v896, 1.442695
    %v902 = vpow.pop %v901
    %v903 = vadd.f32 %v883, %v898
    %v904 = vadd.f32 %v884, %v900
    %v905 = vadd.f32 %v885, %v902
    %v906 = vld [vmem:[#allocation2 + $0x20] sm:$0xfc]
    %v907 = vld [vmem:[#allocation2 + $0x90] sm:$0x3]
    %v910 = vrot.slane %v906, 1
    %v911 = vrot.slane %v763, 1
    %v912 = vsel %vm691, %v910, %v911
    %v913 = vrot.slane %v907, 1
    %v914 = vsel %vm691, %v911, %v913
    %v918 = vmul.f32 %v898, %v912
    %v919 = vmul.f32 %v900, %v914
    %v920 = vmul.f32 %v902, %v913
    %v921 = vadd.f32 %v891, %v918
    %v922 = vadd.f32 %v892, %v919
    %v923 = vadd.f32 %v893, %v920
    %v924 = vsub.f32 %v722, %v747
    %v925 = vsub.f32 %v723, %v748
    %v926 = vsub.f32 %v724, %v749
    %v927 = vmul.f32 %v924, 1.442695
    %v928 = vpow.pop %v927
    %v929 = vmul.f32 %v925, 1.442695
    %v930 = vpow.pop %v929
    %v931 = vmul.f32 %v926, 1.442695
    %v932 = vpow.pop %v931
    %v933 = vadd.f32 %v903, %v928
    %v934 = vadd.f32 %v904, %v930
    %v935 = vadd.f32 %v905, %v932
    %v936 = vld [vmem:[#allocation2 + $0x28] sm:$0xfc]
    %v937 = vld [vmem:[#allocation2 + $0x98] sm:$0x3]
    %v940 = vrot.slane %v936, 1
    %v941 = vrot.slane %v791, 1
    %v942 = vsel %vm691, %v940, %v941
    %v943 = vrot.slane %v937, 1
    %v944 = vsel %vm691, %v941, %v943
    %v948 = vmul.f32 %v928, %v942
    %v949 = vmul.f32 %v930, %v944
    %v950 = vmul.f32 %v932, %v943
    %v951 = vadd.f32 %v921, %v948
    %v952 = vadd.f32 %v922, %v949
    %v953 = vadd.f32 %v923, %v950
    %v954 = vsub.f32 %v744, %v747
    %v955 = vsub.f32 %v745, %v748
    %v956 = vsub.f32 %v746, %v749
    %v957 = vmul.f32 %v954, 1.442695
    %v958 = vpow.pop %v957
    %v959 = vmul.f32 %v955, 1.442695
    %v960 = vpow.pop %v959
    %v961 = vmul.f32 %v956, 1.442695
    %v962 = vpow.pop %v961
    %v963 = vadd.f32 %v933, %v958
    %v964 = vadd.f32 %v934, %v960
    %v965 = vadd.f32 %v935, %v962
    %v966 = vld [vmem:[#allocation2 + $0x30] sm:$0xfc]
    %v967 = vld [vmem:[#allocation2 + $0xa0] sm:$0x3]
    %v970 = vrot.slane %v966, 1
    %v971 = vrot.slane %v819, 1
    %v972 = vsel %vm691, %v970, %v971
    %v973 = vrot.slane %v967, 1
    %v974 = vsel %vm691, %v971, %v973
    %v978 = vmul.f32 %v958, %v972
    %v979 = vmul.f32 %v960, %v974
    %v980 = vmul.f32 %v962, %v973
    %v981 = vadd.f32 %v951, %v978
    %v982 = vadd.f32 %v952, %v979
    %v983 = vadd.f32 %v953, %v980
    %v984 = vrcp.pop %v963
    %v985 = vrcp.pop %v964
    %v986 = vrcp.pop %v965
    %v987 = vmul.f32 %v981, %v984
    %v988 = vmul.f32 %v982, %v985
    %v989 = vmul.f32 %v983, %v986
    %990 = vst [vmem:[#allocation9 - $0x1] sm:$0xfe] %v987
    %991 = vst [vmem:[#allocation9 + $0x7] sm:$0xff] %v988
    %992 = vst [vmem:[#allocation9 + $0xf] sm:$0x1] %v989
    %v993 = vld [vmem:[#allocation2 + $0x70] sm:$0xf8]
    %v994 = vld [vmem:[#allocation2 + $0xa8] sm:$0xff]
    %v995 = vld [vmem:[#allocation2 + $0xe0] sm:$0x7]
    %v996 = vld [vmem:[#allocation2 + $0x78] sm:$0xfc]
    %v997 = vld [vmem:[#allocation2 + $0xb0] sm:$0xff]
    %v998 = vld [vmem:[#allocation2 + $0xe8] sm:$0x3]
    %v999 = vadd.f32 %v996, %v554
    %v1000 = vadd.f32 %v997, %v554
    %v1001 = vadd.f32 %v998, %v554
    %v1005 = vrot.slane %v999, 7
    %v1006 = vrot.slane %v1000, 7
    %v1007 = vsel %vm604, %v1005, %v1006
    %v1008 = vrot.slane %v1001, 7
    %v1009 = vsel %vm604, %v1006, %v1008
    %v1013 = vmul.f32 %v993, %v1005
    %v1014 = vmul.f32 %v994, %v1007
    %v1015 = vmul.f32 %v995, %v1009
    %v1016 = vld [vmem:[#allocation2 + $0x80] sm:$0xfc]
    %v1017 = vld [vmem:[#allocation2 + $0xb8] sm:$0xff]
    %v1018 = vld [vmem:[#allocation2 + $0xf0] sm:$0x3]
    %v1019 = vadd.f32 %v1016, %v559
    %v1020 = vadd.f32 %v1017, %v559
    %v1021 = vadd.f32 %v1018, %v559
    %v1025 = vrot.slane %v1019, 7
    %v1026 = vrot.slane %v1020, 7
    %v1027 = vsel %vm604, %v1025, %v1026
    %v1028 = vrot.slane %v1021, 7
    %v1029 = vsel %vm604, %v1026, %v1028
    %v1033 = vmul.f32 %v993, %v1025
    %v1034 = vmul.f32 %v994, %v1027
    %v1035 = vmul.f32 %v995, %v1029
    %v1036 = vmax.f32 %v1013, %v1033
    %v1037 = vmax.f32 %v1014, %v1034
    %v1038 = vmax.f32 %v1015, %v1035
    %v1039 = vld [vmem:[#allocation2 + $0x88] sm:$0xfc]
    %v1040 = vld [vmem:[#allocation2 + $0xc0] sm:$0xff]
    %v1041 = vld [vmem:[#allocation2 + $0xf8] sm:$0x3]
    %v1042 = vadd.f32 %v1039, %v564
    %v1043 = vadd.f32 %v1040, %v564
    %v1044 = vadd.f32 %v1041, %v564
    %v1048 = vrot.slane %v1042, 7
    %v1049 = vrot.slane %v1043, 7
    %v1050 = vsel %vm604, %v1048, %v1049
    %v1051 = vrot.slane %v1044, 7
    %v1052 = vsel %vm604, %v1049, %v1051
    %v1056 = vmul.f32 %v993, %v1048
    %v1057 = vmul.f32 %v994, %v1050
    %v1058 = vmul.f32 %v995, %v1052
    %v1059 = vmax.f32 %v1036, %v1056
    %v1060 = vmax.f32 %v1037, %v1057
    %v1061 = vmax.f32 %v1038, %v1058
    %v1062 = vld [vmem:[#allocation2 + $0x78] sm:$0xf8]
    %v1063 = vld [vmem:[#allocation2 + $0xe8] sm:$0x7]
    %v1064 = vadd.f32 %v1062, %v569
    %v1065 = vadd.f32 %v997, %v569
    %v1066 = vadd.f32 %v1063, %v569
    %v1067 = vmul.f32 %v993, %v1064
    %v1068 = vmul.f32 %v994, %v1065
    %v1069 = vmul.f32 %v995, %v1066
    %v1070 = vmax.f32 %v1059, %v1067
    %v1071 = vmax.f32 %v1060, %v1068
    %v1072 = vmax.f32 %v1061, %v1069
    %v1073 = vld [vmem:[#allocation2 + $0x80] sm:$0xf8]
    %v1074 = vld [vmem:[#allocation2 + $0xf0] sm:$0x7]
    %v1075 = vadd.f32 %v1073, %v574
    %v1076 = vadd.f32 %v1017, %v574
    %v1077 = vadd.f32 %v1074, %v574
    %v1078 = vmul.f32 %v993, %v1075
    %v1079 = vmul.f32 %v994, %v1076
    %v1080 = vmul.f32 %v995, %v1077
    %v1081 = vmax.f32 %v1070, %v1078
    %v1082 = vmax.f32 %v1071, %v1079
    %v1083 = vmax.f32 %v1072, %v1080
    %v1084 = vld [vmem:[#allocation2 + $0x88] sm:$0xf8]
    %v1085 = vld [vmem:[#allocation2 + $0xf8] sm:$0x7]
    %v1086 = vadd.f32 %v1084, %v579
    %v1087 = vadd.f32 %v1040, %v579
    %v1088 = vadd.f32 %v1085, %v579
    %v1089 = vmul.f32 %v993, %v1086
    %v1090 = vmul.f32 %v994, %v1087
    %v1091 = vmul.f32 %v995, %v1088
    %v1092 = vmax.f32 %v1081, %v1089
    %v1093 = vmax.f32 %v1082, %v1090
    %v1094 = vmax.f32 %v1083, %v1091
    %v1095 = vld [vmem:[#allocation2 + $0x78] sm:$0xf0]
    %v1096 = vld [vmem:[#allocation2 + $0xe8] sm:$0xf]
    %v1097 = vadd.f32 %v1095, %v584
    %v1098 = vadd.f32 %v997, %v584
    %v1099 = vadd.f32 %v1096, %v584
    %v1103 = vrot.slane %v1097, 1
    %v1104 = vrot.slane %v1098, 1
    %v1105 = vsel %vm691, %v1103, %v1104
    %v1106 = vrot.slane %v1099, 1
    %v1107 = vsel %vm691, %v1104, %v1106
    %v1111 = vmul.f32 %v993, %v1105
    %v1112 = vmul.f32 %v994, %v1107
    %v1113 = vmul.f32 %v995, %v1106
    %v1114 = vmax.f32 %v1092, %v1111
    %v1115 = vmax.f32 %v1093, %v1112
    %v1116 = vmax.f32 %v1094, %v1113
    %v1117 = vld [vmem:[#allocation2 + $0x80] sm:$0xf0]
    %v1118 = vld [vmem:[#allocation2 + $0xf0] sm:$0xf]
    %v1119 = vadd.f32 %v1117, %v589
    %v1120 = vadd.f32 %v1017, %v589
    %v1121 = vadd.f32 %v1118, %v589
    %v1125 = vrot.slane %v1119, 1
    %v1126 = vrot.slane %v1120, 1
    %v1127 = vsel %vm691, %v1125, %v1126
    %v1128 = vrot.slane %v1121, 1
    %v1129 = vsel %vm691, %v1126, %v1128
    %v1133 = vmul.f32 %v993, %v1127
    %v1134 = vmul.f32 %v994, %v1129
    %v1135 = vmul.f32 %v995, %v1128
    %v1136 = vmax.f32 %v1114, %v1133
    %v1137 = vmax.f32 %v1115, %v1134
    %v1138 = vmax.f32 %v1116, %v1135
    %v1139 = vld [vmem:[#allocation2 + $0x88] sm:$0xf0]
    %v1140 = vld [vmem:[#allocation2 + $0xf8] sm:$0xf]
    %v1141 = vadd.f32 %v1139, %v594
    %v1142 = vadd.f32 %v1040, %v594
    %v1143 = vadd.f32 %v1140, %v594
    %v1147 = vrot.slane %v1141, 1
    %v1148 = vrot.slane %v1142, 1
    %v1149 = vsel %vm691, %v1147, %v1148
    %v1150 = vrot.slane %v1143, 1
    %v1151 = vsel %vm691, %v1148, %v1150
    %v1155 = vmul.f32 %v993, %v1149
    %v1156 = vmul.f32 %v994, %v1151
    %v1157 = vmul.f32 %v995, %v1150
    %v1158 = vmax.f32 %v1136, %v1155
    %v1159 = vmax.f32 %v1137, %v1156
    %v1160 = vmax.f32 %v1138, %v1157
    %v1161 = vsub.f32 %v1013, %v1158
    %v1162 = vsub.f32 %v1014, %v1159
    %v1163 = vsub.f32 %v1015, %v1160
    %v1164 = vmul.f32 %v1161, 1.442695
    %v1165 = vpow.pop %v1164
    %v1166 = vmul.f32 %v1162, 1.442695
    %v1167 = vpow.pop %v1166
    %v1168 = vmul.f32 %v1163, 1.442695
    %v1169 = vpow.pop %v1168
    %v1170 = vadd.f32 %v1165, 0.0
    %v1171 = vadd.f32 %v1167, 0.0
    %v1172 = vadd.f32 %v1169, 0.0
    %v1173 = vld [vmem:[#allocation2 + $0x90] sm:$0xfc]
    %v1174 = vld [vmem:[#allocation2 + $0xc8] sm:$0xff]
    %v1175 = vld [vmem:[#allocation2 + $0x100] sm:$0x3]
    %v1179 = vrot.slane %v1173, 7
    %v1180 = vrot.slane %v1174, 7
    %v1181 = vsel %vm604, %v1179, %v1180
    %v1182 = vrot.slane %v1175, 7
    %v1183 = vsel %vm604, %v1180, %v1182
    %v1187 = vmul.f32 %v1165, %v1179
    %v1188 = vmul.f32 %v1167, %v1181
    %v1189 = vmul.f32 %v1169, %v1183
    %v1190 = vadd.f32 %v1187, 0.0
    %v1191 = vadd.f32 %v1188, 0.0
    %v1192 = vadd.f32 %v1189, 0.0
    %v1193 = vsub.f32 %v1033, %v1158
    %v1194 = vsub.f32 %v1034, %v1159
    %v1195 = vsub.f32 %v1035, %v1160
    %v1196 = vmul.f32 %v1193, 1.442695
    %v1197 = vpow.pop %v1196
    %v1198 = vmul.f32 %v1194, 1.442695
    %v1199 = vpow.pop %v1198
    %v1200 = vmul.f32 %v1195, 1.442695
    %v1201 = vpow.pop %v1200
    %v1202 = vadd.f32 %v1170, %v1197
    %v1203 = vadd.f32 %v1171, %v1199
    %v1204 = vadd.f32 %v1172, %v1201
    %v1205 = vld [vmem:[#allocation2 + $0x98] sm:$0xfc]
    %v1206 = vld [vmem:[#allocation2 + $0xd0] sm:$0xff]
    %v1207 = vld [vmem:[#allocation2 + $0x108] sm:$0x3]
    %v1211 = vrot.slane %v1205, 7
    %v1212 = vrot.slane %v1206, 7
    %v1213 = vsel %vm604, %v1211, %v1212
    %v1214 = vrot.slane %v1207, 7
    %v1215 = vsel %vm604, %v1212, %v1214
    %v1219 = vmul.f32 %v1197, %v1211
    %v1220 = vmul.f32 %v1199, %v1213
    %v1221 = vmul.f32 %v1201, %v1215
    %v1222 = vadd.f32 %v1190, %v1219
    %v1223 = vadd.f32 %v1191, %v1220
    %v1224 = vadd.f32 %v1192, %v1221
    %v1225 = vsub.f32 %v1056, %v1158
    %v1226 = vsub.f32 %v1057, %v1159
    %v1227 = vsub.f32 %v1058, %v1160
    %v1228 = vmul.f32 %v1225, 1.442695
    %v1229 = vpow.pop %v1228
    %v1230 = vmul.f32 %v1226, 1.442695
    %v1231 = vpow.pop %v1230
    %v1232 = vmul.f32 %v1227, 1.442695
    %v1233 = vpow.pop %v1232
    %v1234 = vadd.f32 %v1202, %v1229
    %v1235 = vadd.f32 %v1203, %v1231
    %v1236 = vadd.f32 %v1204, %v1233
    %v1237 = vld [vmem:[#allocation2 + $0xa0] sm:$0xfc]
    %v1238 = vld [vmem:[#allocation2 + $0xd8] sm:$0xff]
    %v1239 = vld [vmem:[#allocation2 + $0x110] sm:$0x3]
    %v1243 = vrot.slane %v1237, 7
    %v1244 = vrot.slane %v1238, 7
    %v1245 = vsel %vm604, %v1243, %v1244
    %v1246 = vrot.slane %v1239, 7
    %v1247 = vsel %vm604, %v1244, %v1246
    %v1251 = vmul.f32 %v1229, %v1243
    %v1252 = vmul.f32 %v1231, %v1245
    %v1253 = vmul.f32 %v1233, %v1247
    %v1254 = vadd.f32 %v1222, %v1251
    %v1255 = vadd.f32 %v1223, %v1252
    %v1256 = vadd.f32 %v1224, %v1253
    %v1257 = vsub.f32 %v1067, %v1158
    %v1258 = vsub.f32 %v1068, %v1159
    %v1259 = vsub.f32 %v1069, %v1160
    %v1260 = vmul.f32 %v1257, 1.442695
    %v1261 = vpow.pop %v1260
    %v1262 = vmul.f32 %v1258, 1.442695
    %v1263 = vpow.pop %v1262
    %v1264 = vmul.f32 %v1259, 1.442695
    %v1265 = vpow.pop %v1264
    %v1266 = vadd.f32 %v1234, %v1261
    %v1267 = vadd.f32 %v1235, %v1263
    %v1268 = vadd.f32 %v1236, %v1265
    %v1269 = vld [vmem:[#allocation2 + $0x90] sm:$0xf8]
    %v1270 = vld [vmem:[#allocation2 + $0x100] sm:$0x7]
    %v1271 = vmul.f32 %v1261, %v1269
    %v1272 = vmul.f32 %v1263, %v1174
    %v1273 = vmul.f32 %v1265, %v1270
    %v1274 = vadd.f32 %v1254, %v1271
    %v1275 = vadd.f32 %v1255, %v1272
    %v1276 = vadd.f32 %v1256, %v1273
    %v1277 = vsub.f32 %v1078, %v1158
    %v1278 = vsub.f32 %v1079, %v1159
    %v1279 = vsub.f32 %v1080, %v1160
    %v1280 = vmul.f32 %v1277, 1.442695
    %v1281 = vpow.pop %v1280
    %v1282 = vmul.f32 %v1278, 1.442695
    %v1283 = vpow.pop %v1282
    %v1284 = vmul.f32 %v1279, 1.442695
    %v1285 = vpow.pop %v1284
    %v1286 = vadd.f32 %v1266, %v1281
    %v1287 = vadd.f32 %v1267, %v1283
    %v1288 = vadd.f32 %v1268, %v1285
    %v1289 = vld [vmem:[#allocation2 + $0x98] sm:$0xf8]
    %v1290 = vld [vmem:[#allocation2 + $0x108] sm:$0x7]
    %v1291 = vmul.f32 %v1281, %v1289
    %v1292 = vmul.f32 %v1283, %v1206
    %v1293 = vmul.f32 %v1285, %v1290
    %v1294 = vadd.f32 %v1274, %v1291
    %v1295 = vadd.f32 %v1275, %v1292
    %v1296 = vadd.f32 %v1276, %v1293
    %v1297 = vsub.f32 %v1089, %v1158
    %v1298 = vsub.f32 %v1090, %v1159
    %v1299 = vsub.f32 %v1091, %v1160
    %v1300 = vmul.f32 %v1297, 1.442695
    %v1301 = vpow.pop %v1300
    %v1302 = vmul.f32 %v1298, 1.442695
    %v1303 = vpow.pop %v1302
    %v1304 = vmul.f32 %v1299, 1.442695
    %v1305 = vpow.pop %v1304
    %v1306 = vadd.f32 %v1286, %v1301
    %v1307 = vadd.f32 %v1287, %v1303
    %v1308 = vadd.f32 %v1288, %v1305
    %v1309 = vld [vmem:[#allocation2 + $0xa0] sm:$0xf8]
    %v1310 = vld [vmem:[#allocation2 + $0x110] sm:$0x7]
    %v1311 = vmul.f32 %v1301, %v1309
    %v1312 = vmul.f32 %v1303, %v1238
    %v1313 = vmul.f32 %v1305, %v1310
    %v1314 = vadd.f32 %v1294, %v1311
    %v1315 = vadd.f32 %v1295, %v1312
    %v1316 = vadd.f32 %v1296, %v1313
    %v1317 = vsub.f32 %v1111, %v1158
    %v1318 = vsub.f32 %v1112, %v1159
    %v1319 = vsub.f32 %v1113, %v1160
    %v1320 = vmul.f32 %v1317, 1.442695
    %v1321 = vpow.pop %v1320
    %v1322 = vmul.f32 %v1318, 1.442695
    %v1323 = vpow.pop %v1322
    %v1324 = vmul.f32 %v1319, 1.442695
    %v1325 = vpow.pop %v1324
    %v1326 = vadd.f32 %v1306, %v1321
    %v1327 = vadd.f32 %v1307, %v1323
    %v1328 = vadd.f32 %v1308, %v1325
    %v1329 = vld [vmem:[#allocation2 + $0x90] sm:$0xf0]
    %v1330 = vld [vmem:[#allocation2 + $0x100] sm:$0xf]
    %v1333 = vrot.slane %v1329, 1
    %v1334 = vrot.slane %v1174, 1
    %v1335 = vsel %vm691, %v1333, %v1334
    %v1336 = vrot.slane %v1330, 1
    %v1337 = vsel %vm691, %v1334, %v1336
    %v1341 = vmul.f32 %v1321, %v1335
    %v1342 = vmul.f32 %v1323, %v1337
    %v1343 = vmul.f32 %v1325, %v1336
    %v1344 = vadd.f32 %v1314, %v1341
    %v1345 = vadd.f32 %v1315, %v1342
    %v1346 = vadd.f32 %v1316, %v1343
    %v1347 = vsub.f32 %v1133, %v1158
    %v1348 = vsub.f32 %v1134, %v1159
    %v1349 = vsub.f32 %v1135, %v1160
    %v1350 = vmul.f32 %v1347, 1.442695
    %v1351 = vpow.pop %v1350
    %v1352 = vmul.f32 %v1348, 1.442695
    %v1353 = vpow.pop %v1352
    %v1354 = vmul.f32 %v1349, 1.442695
    %v1355 = vpow.pop %v1354
    %v1356 = vadd.f32 %v1326, %v1351
    %v1357 = vadd.f32 %v1327, %v1353
    %v1358 = vadd.f32 %v1328, %v1355
    %v1359 = vld [vmem:[#allocation2 + $0x98] sm:$0xf0]
    %v1360 = vld [vmem:[#allocation2 + $0x108] sm:$0xf]
    %v1363 = vrot.slane %v1359, 1
    %v1364 = vrot.slane %v1206, 1
    %v1365 = vsel %vm691, %v1363, %v1364
    %v1366 = vrot.slane %v1360, 1
    %v1367 = vsel %vm691, %v1364, %v1366
    %v1371 = vmul.f32 %v1351, %v1365
    %v1372 = vmul.f32 %v1353, %v1367
    %v1373 = vmul.f32 %v1355, %v1366
    %v1374 = vadd.f32 %v1344, %v1371
    %v1375 = vadd.f32 %v1345, %v1372
    %v1376 = vadd.f32 %v1346, %v1373
    %v1377 = vsub.f32 %v1155, %v1158
    %v1378 = vsub.f32 %v1156, %v1159
    %v1379 = vsub.f32 %v1157, %v1160
    %v1380 = vmul.f32 %v1377, 1.442695
    %v1381 = vpow.pop %v1380
    %v1382 = vmul.f32 %v1378, 1.442695
    %v1383 = vpow.pop %v1382
    %v1384 = vmul.f32 %v1379, 1.442695
    %v1385 = vpow.pop %v1384
    %v1386 = vadd.f32 %v1356, %v1381
    %v1387 = vadd.f32 %v1357, %v1383
    %v1388 = vadd.f32 %v1358, %v1385
    %v1389 = vld [vmem:[#allocation2 + $0xa0] sm:$0xf0]
    %v1390 = vld [vmem:[#allocation2 + $0x110] sm:$0xf]
    %v1393 = vrot.slane %v1389, 1
    %v1394 = vrot.slane %v1238, 1
    %v1395 = vsel %vm691, %v1393, %v1394
    %v1396 = vrot.slane %v1390, 1
    %v1397 = vsel %vm691, %v1394, %v1396
    %v1401 = vmul.f32 %v1381, %v1395
    %v1402 = vmul.f32 %v1383, %v1397
    %v1403 = vmul.f32 %v1385, %v1396
    %v1404 = vadd.f32 %v1374, %v1401
    %v1405 = vadd.f32 %v1375, %v1402
    %v1406 = vadd.f32 %v1376, %v1403
    %v1407 = vrcp.pop %v1386
    %v1408 = vrcp.pop %v1387
    %v1409 = vrcp.pop %v1388
    %v1410 = vmul.f32 %v1404, %v1407
    %v1411 = vmul.f32 %v1405, %v1408
    %v1412 = vmul.f32 %v1406, %v1409
    %s1413 = scalar_lea.vmem [#allocation9], 16
    %1414 = vst [vmem:[%s1413 - $0x3] sm:$0xf8] %v1410
    %1415 = vst [vmem:[%s1413 + $0x5] sm:$0xff] %v1411
    %1416 = vst [vmem:[%s1413 + $0xd] sm:$0x7] %v1412
    // Predicated region
    $region26: #{tpu_custom_call.1} parent=1 // pred_check
      _
    $region27: #{tpu_custom_call.1} parent=1 // pred_check_branch
      %1418 = sbr.rel (0) target = $region29
    $region28: #{tpu_custom_call.1} parent=1 // pred_region
      %s1420 = ssub.s32 512, 512
      %1421 = vsyncadd [#allocation5], %s1420
      %s1422 = sshll.u32 [#allocation9], 4
      %s1423 = int_to_ptr.vmem [resolvable:$true] %s1422
      %1428 = dma.vmem_to_hbm [thread:$0]  %s1423, 512, %s3, [#allocation5], 128, 128, 8
    $region29: #{tpu_custom_call.1} parent=1 // pred_fallthru
      _
    // Predicated region
    $region30: #{tpu_custom_call.1} parent=1 // pred_check
      _
    $region31: #{tpu_custom_call.1} parent=1 // pred_check_branch
      %1430 = sbr.rel (0) target = $region33
    $region32: #{tpu_custom_call.1} parent=1 // pred_region
      %1431 = dma.done [#allocation5], 512
    $region33: #{tpu_custom_call.1} parent=1 // pred_fallthru
      _
    %1432 = vsyncpa [#allocation4], 1
    %1433 = vsyncpa [#allocation7], 1
    %1434 = vsyncpa [#allocation5], 1

</llo_original>
